<compile_context>
chip_gen: v6e
topology: v6e:2x2x1
jax: 0.10.0
libtpu: 0.0.40
codegen_flags: <defaults>
</compile_context>

<pallas_src>
import functools
import math

import jax
import jax.numpy as jnp
from jax.experimental import pallas as pl
from jax.experimental.pallas import tpu as pltpu


# ----------------------------- in-kernel helpers -----------------------------

def _ln(x, w, b, eps):
    # PyTorch nn.LayerNorm: biased variance over last dim (f32 math).
    mu = jnp.mean(x, axis=-1, keepdims=True)
    var = jnp.mean((x - mu) ** 2, axis=-1, keepdims=True)
    return (x - mu) * jax.lax.rsqrt(var + eps) * w + b


def _gelu(x):
    # exact (erf-based) GELU, matching nn.GELU() default
    return 0.5 * x * (1.0 + jax.lax.erf(x * 0.7071067811865476))


def _bf16(x):
    return x.astype(jnp.bfloat16)


# --------------------------------- kernels -----------------------------------

def embed_kernel(x_ref, lnw_ref, lnb_ref, wm_ref, bm_ref, o_ref, *, eps):
    # x_ref: (TILE_M, E) f32 pre-summed word+pos+type embeddings.
    e = _ln(x_ref[...], lnw_ref[...], lnb_ref[...], eps)
    o_ref[...] = jnp.dot(_bf16(e), wm_ref[...],
                         preferred_element_type=jnp.float32) + bm_ref[...]


def encoder_kernel(x_ref, cs_ss_ref, ch_sh_ref,
                   ln1w_ref, ln1b_ref, ffw_ref, ffb_ref,
                   ow_ref, ob_ref, ln2w_ref, ln2b_ref,
                   o_ref, *, eps, hidden):
    # grid = (batch, layer); hidden state lives in o_ref across the layer axis.
    l = pl.program_id(1)

    @pl.when(l == 0)
    def _():
        o_ref[...] = x_ref[...]

    x = o_ref[...]                                               # (S, H) f32
    # Fused real-DFT Fourier mixer:
    #   Re(fft(fft(x,-1),-2)) = C_s@(x@C_h) - S_s@(x@S_h)
    #                         = [C_s|S_s] @ [[x@C_h], [-(x@S_h)]]
    y = jnp.dot(_bf16(x), ch_sh_ref[...],
                preferred_element_type=jnp.float32)              # (S, 2H)
    z = jnp.concatenate([y[:, :hidden], -y[:, hidden:]], axis=0)  # (2S, H)
    fft_real = jnp.dot(cs_ss_ref[...], _bf16(z),
                       preferred_element_type=jnp.float32)       # (S, H)

    mix = _ln(fft_real + x, ln1w_ref[...], ln1b_ref[...], eps)
    inter = _gelu(jnp.dot(_bf16(mix), ffw_ref[...],
                          preferred_element_type=jnp.float32) + ffb_ref[...])
    outd = jnp.dot(_bf16(inter), ow_ref[...],
                   preferred_element_type=jnp.float32) + ob_ref[...]
    o_ref[...] = _ln(outd + mix, ln2w_ref[...], ln2b_ref[...], eps)


def mlm_kernel(x_ref, wi_ref, bi_ref, lnw_ref, lnb_ref, wo_ref, bo_ref,
               o_ref, m_scr, *, eps):
    # grid = (row tiles, vocab tiles); GELU+LN intermediate computed once per
    # row tile (j == 0) and reused for every vocab column tile.
    j = pl.program_id(1)

    @pl.when(j == 0)
    def _():
        m = _gelu(jnp.dot(_bf16(x_ref[...]), wi_ref[...],
                          preferred_element_type=jnp.float32) + bi_ref[...])
        m_scr[...] = _bf16(_ln(m, lnw_ref[...], lnb_ref[...], eps))

    o_ref[...] = jnp.dot(m_scr[...], wo_ref[...],
                         preferred_element_type=jnp.float32) + bo_ref[...]


def pool_nsp_kernel(x0_ref, wp_ref, bp_ref, wn_ref, bn_ref, nsp_ref):
    # x0_ref: (B, H) first-token slice (pre-sliced in the wrapper).
    pooled = jnp.tanh(jnp.dot(_bf16(x0_ref[...]), wp_ref[...],
                              preferred_element_type=jnp.float32) + bp_ref[...])
    # NSP projection padded to 128 lanes (lane-dense store); sliced outside.
    nsp_ref[...] = jnp.dot(_bf16(pooled), wn_ref[...],
                           preferred_element_type=jnp.float32) + bn_ref[...]


# ----------------------------- pallas_call wrappers ---------------------------

_VMEM_FULL = pl.BlockSpec(memory_space=pltpu.MemorySpace.VMEM)
_VMEM_LIMIT = 48 * 1024 * 1024   # leave headroom under v7x's 64 MiB VMEM


def _tile(n, pref):
    # Largest legal tile: pref if it divides n, else the full extent.
    if n <= pref or n % pref:
        return n
    return pref


def embeddings_forward(emb_sum, lnw, lnb, wm, bm, eps):
    rows, E = emb_sum.shape
    H = wm.shape[1]
    tm = _tile(rows, 256)
    return pl.pallas_call(
        functools.partial(embed_kernel, eps=eps),
        grid=(rows // tm,),
        in_specs=[pl.BlockSpec((tm, E), lambda i: (i, 0)),
                  _VMEM_FULL, _VMEM_FULL, _VMEM_FULL, _VMEM_FULL],
        out_specs=pl.BlockSpec((tm, H), lambda i: (i, 0)),
        out_shape=jax.ShapeDtypeStruct((rows, H), jnp.float32),
        compiler_params=pltpu.CompilerParams(
            dimension_semantics=("parallel",),
            vmem_limit_bytes=_VMEM_LIMIT),
    )(emb_sum, lnw, lnb, wm, bm)


def encoder_forward(x, cs_ss, ch_sh, lw, eps):
    B, S, H = x.shape
    L, _, I = lw['ff_w'].shape
    lmap = lambda b, l: (l, 0, 0)
    xmap = lambda b, l: (b, 0, 0)
    return pl.pallas_call(
        functools.partial(encoder_kernel, eps=eps, hidden=H),
        grid=(B, L),
        in_specs=[
            pl.BlockSpec((None, S, H), xmap),      # input hidden (read at l==0)
            _VMEM_FULL,                            # [C_s | S_s] (S, 2S) bf16
            _VMEM_FULL,                            # [C_h | S_h] (H, 2H) bf16
            pl.BlockSpec((None, 1, H), lmap),      # ln1_w
            pl.BlockSpec((None, 1, H), lmap),      # ln1_b
            pl.BlockSpec((None, H, I), lmap),      # ff_w (bf16)
            pl.BlockSpec((None, 1, I), lmap),      # ff_b
            pl.BlockSpec((None, I, H), lmap),      # out_w (bf16)
            pl.BlockSpec((None, 1, H), lmap),      # out_b
            pl.BlockSpec((None, 1, H), lmap),      # ln2_w
            pl.BlockSpec((None, 1, H), lmap),      # ln2_b
        ],
        out_specs=pl.BlockSpec((None, S, H), xmap),   # resident across l axis
        out_shape=jax.ShapeDtypeStruct((B, S, H), jnp.float32),
        compiler_params=pltpu.CompilerParams(
            dimension_semantics=("parallel", "arbitrary"),
            vmem_limit_bytes=_VMEM_LIMIT),
    )(x, cs_ss, ch_sh,
      lw['ln1_w'], lw['ln1_b'], lw['ff_w'], lw['ff_b'],
      lw['out_w'], lw['out_b'], lw['ln2_w'], lw['ln2_b'])


def mlm_forward(x2, wi, bi, lnw, lnb, wo, bo, eps):
    rows, H = x2.shape
    E = wi.shape[1]
    V = wo.shape[1]
    tm = _tile(rows, 256)
    tv = _tile(V, 512)
    return pl.pallas_call(
        functools.partial(mlm_kernel, eps=eps),
        grid=(rows // tm, V // tv),
        in_specs=[
            pl.BlockSpec((tm, H), lambda i, j: (i, 0)),
            _VMEM_FULL, _VMEM_FULL, _VMEM_FULL, _VMEM_FULL,
            pl.BlockSpec((E, tv), lambda i, j: (0, j)),    # vocab column tile
            pl.BlockSpec((1, tv), lambda i, j: (0, j)),
        ],
        out_specs=pl.BlockSpec((tm, tv), lambda i, j: (i, j)),
        out_shape=jax.ShapeDtypeStruct((rows, V), jnp.float32),
        scratch_shapes=[pltpu.VMEM((tm, E), jnp.bfloat16)],
        compiler_params=pltpu.CompilerParams(
            dimension_semantics=("parallel", "arbitrary"),
            vmem_limit_bytes=_VMEM_LIMIT),
    )(x2, wi, bi, lnw, lnb, wo, bo)


def pool_nsp_forward(x0, wp, bp, wn_pad, bn_pad):
    B = x0.shape[0]
    return pl.pallas_call(
        pool_nsp_kernel,
        in_specs=[_VMEM_FULL] * 5,
        out_specs=_VMEM_FULL,
        out_shape=jax.ShapeDtypeStruct((B, 128), jnp.float32),
    )(x0, wp, bp, wn_pad, bn_pad)


# ------------------------------- model plumbing -------------------------------

def _dft_cos_sin(n):
    # Exact mod-n reduction of the index product before scaling by 2*pi/n
    # (avoids huge cos/sin arguments for realistic S / H).
    k = jnp.arange(n, dtype=jnp.int32)
    prod_mod = (k[:, None] * k[None, :]) % n
    ang = (2.0 * math.pi / float(n)) * prod_mod.astype(jnp.float32)
    return jnp.cos(ang), jnp.sin(ang)


def init_params(key, cfg):
    E, H = cfg['embedding_size'], cfg['hidden_size']
    I, V = cfg['intermediate_size'], cfg['vocab_size']
    P, T, L = (cfg['max_position_embeddings'], cfg['type_vocab_size'],
               cfg['num_hidden_layers'])
    keys = iter(jax.random.split(key, 64))

    def nrm(shape, scale=0.02):
        return (scale * jax.random.normal(next(keys), shape)).astype(jnp.float32)

    p = {}
    p['word_emb'] = nrm((V, E)).at[cfg['pad_token_id']].set(0.0)
    p['pos_emb'] = nrm((P, E))
    p['type_emb'] = nrm((T, E))
    p['emb_ln_w'] = jnp.ones((E,), jnp.float32)
    p['emb_ln_b'] = jnp.zeros((E,), jnp.float32)
    p['emb_map_w'] = nrm((E, H))
    p['emb_map_b'] = jnp.zeros((H,), jnp.float32)
    p['layers'] = []
    for _ in range(L):
        p['layers'].append(dict(
            ln1_w=jnp.ones((H,), jnp.float32), ln1_b=jnp.zeros((H,), jnp.float32),
            ff_w=nrm((H, I)), ff_b=jnp.zeros((I,), jnp.float32),
            out_w=nrm((I, H)), out_b=jnp.zeros((H,), jnp.float32),
            ln2_w=jnp.ones((H,), jnp.float32), ln2_b=jnp.zeros((H,), jnp.float32),
        ))
    p['pool_w'] = nrm((H, H)); p['pool_b'] = jnp.zeros((H,), jnp.float32)
    p['nsp_w'] = nrm((H, 2)); p['nsp_b'] = jnp.zeros((2,), jnp.float32)
    p['mlm_i_w'] = nrm((H, E)); p['mlm_i_b'] = jnp.zeros((E,), jnp.float32)
    p['mlm_ln_w'] = jnp.ones((E,), jnp.float32); p['mlm_ln_b'] = jnp.zeros((E,), jnp.float32)
    p['mlm_o_w'] = nrm((E, V)); p['mlm_o_b'] = jnp.zeros((V,), jnp.float32)
    return p


def pack_params(p):
    """Cast weights to bf16, reshape biases/LN params to (1, F), stack per-layer
    weights along a leading layer axis for the single encoder pallas_call."""
    bf = jnp.bfloat16
    H = p['pool_w'].shape[0]

    packed = dict(
        emb_ln_w=p['emb_ln_w'][None, :], emb_ln_b=p['emb_ln_b'][None, :],
        emb_map_w=p['emb_map_w'].astype(bf), emb_map_b=p['emb_map_b'][None, :],
        pool_w=p['pool_w'].astype(bf), pool_b=p['pool_b'][None, :],
        mlm_i_w=p['mlm_i_w'].astype(bf), mlm_i_b=p['mlm_i_b'][None, :],
        mlm_ln_w=p['mlm_ln_w'][None, :], mlm_ln_b=p['mlm_ln_b'][None, :],
        mlm_o_w=p['mlm_o_w'].astype(bf), mlm_o_b=p['mlm_o_b'][None, :],
    )
    # NSP head padded to 128 output lanes (lane-dense store on v5e).
    packed['nsp_w_pad'] = (jnp.zeros((H, 128), jnp.float32)
                           .at[:, :2].set(p['nsp_w']).astype(bf))
    packed['nsp_b_pad'] = jnp.zeros((1, 128), jnp.float32).at[0, :2].set(p['nsp_b'])

    def stack(name, vec=False):
        arr = jnp.stack([lp[name] for lp in p['layers']])
        return arr[:, None, :] if vec else arr

    packed['layers'] = dict(
        ln1_w=stack('ln1_w', True), ln1_b=stack('ln1_b', True),
        ff_w=stack('ff_w').astype(bf), ff_b=stack('ff_b', True),
        out_w=stack('out_w').astype(bf), out_b=stack('out_b', True),
        ln2_w=stack('ln2_w', True), ln2_b=stack('ln2_b', True),
    )
    return packed


def fnet_for_pretraining(params, cfg, input_ids, type_ids):
    B, S = input_ids.shape
    H, V = cfg['hidden_size'], cfg['vocab_size']
    eps = cfg['layer_norm_eps']

    pp = pack_params(params)

    # Embedding gathers (data-dependent) + sum: plain JAX glue.
    we = jnp.take(params['word_emb'], input_ids, axis=0)   # (B, S, E)
    te = jnp.take(params['type_emb'], type_ids, axis=0)    # (B, S, E)
    pe = params['pos_emb'][:S]                              # (S, E)
    emb_sum = (we + te + pe[None, :, :]).reshape(B * S, -1)

    hidden = embeddings_forward(emb_sum, pp['emb_ln_w'], pp['emb_ln_b'],
                                pp['emb_map_w'], pp['emb_map_b'], eps)
    hidden = hidden.reshape(B, S, H)

    # Fused real-DFT matrices (cos|sin), bf16 for MXU feed.
    cs, ss = _dft_cos_sin(S)
    ch, sh = _dft_cos_sin(H)
    cs_ss = jnp.concatenate([cs, ss], axis=1).astype(jnp.bfloat16)   # (S, 2S)
    ch_sh = jnp.concatenate([ch, sh], axis=1).astype(jnp.bfloat16)   # (H, 2H)

    # Whole encoder stack in one pallas_call (grid = (B, L)).
    hidden = encoder_forward(hidden, cs_ss, ch_sh, pp['layers'], eps)

    # MLM head over the full sequence (mlm_positions=None path).
    seq_flat = hidden.reshape(B * S, H)
    mlm_flat = mlm_forward(seq_flat, pp['mlm_i_w'], pp['mlm_i_b'],
                           pp['mlm_ln_w'], pp['mlm_ln_b'],
                           pp['mlm_o_w'], pp['mlm_o_b'],
                           eps=1e-5)   # nn.LayerNorm default eps for mlm_layer_norm
    mlm_logits = mlm_flat.reshape(B, S, V)

    # Pooler (first token) + NSP head; pre-slice token 0 outside the kernel.
    x0 = hidden[:, 0, :]
    nsp_pad = pool_nsp_forward(x0, pp['pool_w'], pp['pool_b'],
                               pp['nsp_w_pad'], pp['nsp_b_pad'])
    nsp_logits = nsp_pad[:, :2]

    return {'mlm_logits': mlm_logits, 'nsp_logits': nsp_logits}


# ----------------------------------- main -------------------------------------

if __name__ == "__main__":
    cfg = dict(
        vocab_size=64,
        embedding_size=32,
        hidden_size=32,
        intermediate_size=64,
        max_position_embeddings=16,
        type_vocab_size=2,
        num_hidden_layers=2,
        pad_token_id=0,
        layer_norm_eps=1e-12,
        dropout_rate=0.0,       # dropout is identity at inference
        fourier='fft',
    )
    B, S = 2, 8

    key = jax.random.PRNGKey(0)
    k_ids, k_types, k_params = jax.random.split(key, 3)
    input_ids = jax.random.randint(k_ids, (B, S), 0, cfg['vocab_size'], dtype=jnp.int32)
    type_ids = jax.random.randint(k_types, (B, S), 0, cfg['type_vocab_size'], dtype=jnp.int32)

    params = init_params(k_params, cfg)

    @jax.jit
    def fwd(params, input_ids, type_ids):
        return fnet_for_pretraining(params, cfg, input_ids, type_ids)

    out = jax.block_until_ready(fwd(params, input_ids, type_ids))

    assert out['mlm_logits'].shape == (B, S, cfg['vocab_size'])
    assert out['nsp_logits'].shape == (B, 2)
    print("KERNEL_OK")
</pallas_src>

<mosaic_0001>
module attributes {stable_mosaic.version = 11 : i64} {
  func.func @embed_kernel(%arg0: i32, %arg1: memref<16x32xf32, #tpu.memory_space<vmem>>, %arg2: memref<1x32xf32, #tpu.memory_space<vmem>>, %arg3: memref<1x32xf32, #tpu.memory_space<vmem>>, %arg4: memref<32x32xbf16, #tpu.memory_space<vmem>>, %arg5: memref<1x32xf32, #tpu.memory_space<vmem>>, %arg6: memref<16x32xf32, #tpu.memory_space<vmem>>) attributes {dimension_semantics = [#tpu.dimension_semantics<parallel>], iteration_bounds = array<i64: 1>, scalar_prefetch = 0 : i64, scratch_operands = 0 : i64, tpu.core_type = #tpu.core_type<tc>, window_params = [{transform_indices = @transform_0, window_bounds = array<i64: 16, 32>}, {pipeline_mode = #tpu.pipeline_mode<synchronous>, transform_indices = @transform_1, window_bounds = array<i64: 1, 32>}, {pipeline_mode = #tpu.pipeline_mode<synchronous>, transform_indices = @transform_2, window_bounds = array<i64: 1, 32>}, {pipeline_mode = #tpu.pipeline_mode<synchronous>, transform_indices = @transform_3, window_bounds = array<i64: 32, 32>}, {pipeline_mode = #tpu.pipeline_mode<synchronous>, transform_indices = @transform_4, window_bounds = array<i64: 1, 32>}, {transform_indices = @transform_5, window_bounds = array<i64: 16, 32>}]} {
    %c0 = arith.constant 0 : index
    %c0_0 = arith.constant 0 : index
    %0 = vector.load %arg1[%c0, %c0_0] : memref<16x32xf32, #tpu.memory_space<vmem>>, vector<16x32xf32>
    %c0_1 = arith.constant 0 : index
    %c0_2 = arith.constant 0 : index
    %1 = vector.load %arg2[%c0_1, %c0_2] : memref<1x32xf32, #tpu.memory_space<vmem>>, vector<1x32xf32>
    %c0_3 = arith.constant 0 : index
    %c0_4 = arith.constant 0 : index
    %2 = vector.load %arg3[%c0_3, %c0_4] : memref<1x32xf32, #tpu.memory_space<vmem>>, vector<1x32xf32>
    %cst = arith.constant dense<0.000000e+00> : vector<16xf32>
    %3 = vector.multi_reduction <add>, %0, %cst [1] : vector<16x32xf32> to vector<16xf32>
    %4 = vector.shape_cast %3 : vector<16xf32> to vector<16x1xf32>
    %cst_5 = arith.constant 3.200000e+01 : f32
    %5 = vector.broadcast %cst_5 : f32 to vector<16x1xf32>
    %6 = arith.divf %4, %5 : vector<16x1xf32>
    %7 = vector.broadcast %6 : vector<16x1xf32> to vector<16x32xf32>
    %8 = arith.subf %0, %7 : vector<16x32xf32>
    %9 = arith.mulf %8, %8 : vector<16x32xf32>
    %cst_6 = arith.constant dense<0.000000e+00> : vector<16xf32>
    %10 = vector.multi_reduction <add>, %9, %cst_6 [1] : vector<16x32xf32> to vector<16xf32>
    %11 = vector.shape_cast %10 : vector<16xf32> to vector<16x1xf32>
    %cst_7 = arith.constant 3.200000e+01 : f32
    %12 = vector.broadcast %cst_7 : f32 to vector<16x1xf32>
    %13 = arith.divf %11, %12 : vector<16x1xf32>
    %14 = vector.broadcast %6 : vector<16x1xf32> to vector<16x32xf32>
    %15 = arith.subf %0, %14 : vector<16x32xf32>
    %cst_8 = arith.constant 9.99999996E-13 : f32
    %16 = vector.broadcast %cst_8 : f32 to vector<16x1xf32>
    %17 = arith.addf %13, %16 : vector<16x1xf32>
    %18 = math.rsqrt %17 : vector<16x1xf32>
    %19 = vector.broadcast %18 : vector<16x1xf32> to vector<16x32xf32>
    %20 = arith.mulf %15, %19 : vector<16x32xf32>
    %21 = vector.broadcast %1 : vector<1x32xf32> to vector<16x32xf32>
    %22 = arith.mulf %20, %21 : vector<16x32xf32>
    %23 = vector.broadcast %2 : vector<1x32xf32> to vector<16x32xf32>
    %24 = arith.addf %22, %23 : vector<16x32xf32>
    %25 = arith.truncf %24 : vector<16x32xf32> to vector<16x32xbf16>
    %c0_9 = arith.constant 0 : index
    %c0_10 = arith.constant 0 : index
    %26 = vector.load %arg4[%c0_9, %c0_10] : memref<32x32xbf16, #tpu.memory_space<vmem>>, vector<32x32xbf16>
    %cst_11 = arith.constant dense<0.000000e+00> : vector<16x32xf32>
    %27 = tpu.matmul %25, %26, %cst_11 {dimension_numbers = #tpu.dot_dimension_numbers<[1], [0], [0], [1], [0, 0, 1, 1], [], []>} : vector<16x32xbf16>, vector<32x32xbf16>, vector<16x32xf32> -> vector<16x32xf32>
    %c0_12 = arith.constant 0 : index
    %c0_13 = arith.constant 0 : index
    %28 = vector.load %arg5[%c0_12, %c0_13] : memref<1x32xf32, #tpu.memory_space<vmem>>, vector<1x32xf32>
    %29 = vector.broadcast %28 : vector<1x32xf32> to vector<16x32xf32>
    %30 = arith.addf %27, %29 : vector<16x32xf32>
    %c0_14 = arith.constant 0 : index
    %c0_15 = arith.constant 0 : index
    %31 = vector.load %arg6[%c0_14, %c0_15] : memref<16x32xf32, #tpu.memory_space<vmem>>, vector<16x32xf32>
    tpu.vector_store %arg6[%c0_14, %c0_15], %30 {strides = array<i32>} : memref<16x32xf32, #tpu.memory_space<vmem>>, vector<16x32xf32>,
    return
  }
  func.func @transform_0(%arg0: i32) -> (i32, i32) {
    %c0_i32 = arith.constant 0 : i32
    %c0_i32_0 = arith.constant 0 : i32
    return %arg0, %c0_i32 : i32, i32
  }
  func.func @transform_1(%arg0: i32) -> (i32, i32) {
    %c0_i32 = arith.constant 0 : i32
    %c0_i32_0 = arith.constant 0 : i32
    %c0_i32_1 = arith.constant 0 : i32
    return %c0_i32, %c0_i32_0 : i32, i32
  }
  func.func @transform_2(%arg0: i32) -> (i32, i32) {
    %c0_i32 = arith.constant 0 : i32
    %c0_i32_0 = arith.constant 0 : i32
    %c0_i32_1 = arith.constant 0 : i32
    return %c0_i32, %c0_i32_0 : i32, i32
  }
  func.func @transform_3(%arg0: i32) -> (i32, i32) {
    %c0_i32 = arith.constant 0 : i32
    %c0_i32_0 = arith.constant 0 : i32
    %c0_i32_1 = arith.constant 0 : i32
    return %c0_i32, %c0_i32_0 : i32, i32
  }
  func.func @transform_4(%arg0: i32) -> (i32, i32) {
    %c0_i32 = arith.constant 0 : i32
    %c0_i32_0 = arith.constant 0 : i32
    %c0_i32_1 = arith.constant 0 : i32
    return %c0_i32, %c0_i32_0 : i32, i32
  }
  func.func @transform_5(%arg0: i32) -> (i32, i32) {
    %c0_i32 = arith.constant 0 : i32
    %c0_i32_0 = arith.constant 0 : i32
    return %arg0, %c0_i32 : i32, i32
  }
}

module attributes {stable_mosaic.version = 11 : i64} {
  func.func @encoder_kernel(%arg0: i32, %arg1: i32, %arg2: memref<1x8x32xf32, #tpu.memory_space<vmem>>, %arg3: memref<8x16xbf16, #tpu.memory_space<vmem>>, %arg4: memref<32x64xbf16, #tpu.memory_space<vmem>>, %arg5: memref<1x1x32xf32, #tpu.memory_space<vmem>>, %arg6: memref<1x1x32xf32, #tpu.memory_space<vmem>>, %arg7: memref<1x32x64xbf16, #tpu.memory_space<vmem>>, %arg8: memref<1x1x64xf32, #tpu.memory_space<vmem>>, %arg9: memref<1x64x32xbf16, #tpu.memory_space<vmem>>, %arg10: memref<1x1x32xf32, #tpu.memory_space<vmem>>, %arg11: memref<1x1x32xf32, #tpu.memory_space<vmem>>, %arg12: memref<1x1x32xf32, #tpu.memory_space<vmem>>, %arg13: memref<1x8x32xf32, #tpu.memory_space<vmem>>) attributes {dimension_semantics = [#tpu.dimension_semantics<parallel>, #tpu.dimension_semantics<arbitrary>], iteration_bounds = array<i64: 2, 2>, scalar_prefetch = 0 : i64, scratch_operands = 0 : i64, tpu.core_type = #tpu.core_type<tc>, window_params = [{transform_indices = @transform_0, window_bounds = array<i64: 1, 8, 32>}, {pipeline_mode = #tpu.pipeline_mode<synchronous>, transform_indices = @transform_1, window_bounds = array<i64: 8, 16>}, {pipeline_mode = #tpu.pipeline_mode<synchronous>, transform_indices = @transform_2, window_bounds = array<i64: 32, 64>}, {transform_indices = @transform_3, window_bounds = array<i64: 1, 1, 32>}, {transform_indices = @transform_4, window_bounds = array<i64: 1, 1, 32>}, {transform_indices = @transform_5, window_bounds = array<i64: 1, 32, 64>}, {transform_indices = @transform_6, window_bounds = array<i64: 1, 1, 64>}, {transform_indices = @transform_7, window_bounds = array<i64: 1, 64, 32>}, {transform_indices = @transform_8, window_bounds = array<i64: 1, 1, 32>}, {transform_indices = @transform_9, window_bounds = array<i64: 1, 1, 32>}, {transform_indices = @transform_10, window_bounds = array<i64: 1, 1, 32>}, {transform_indices = @transform_11, window_bounds = array<i64: 1, 8, 32>}]} {
    %c0_i32 = arith.constant 0 : i32
    %0 = arith.cmpi eq, %arg1, %c0_i32 : i32
    %1 = arith.extui %0 : i1 to i32
    %c0_i32_0 = arith.constant 0 : i32
    %2 = arith.cmpi ne, %1, %c0_i32_0 : i32
    scf.if %2 {
      %c0_51 = arith.constant 0 : index
      %c0_52 = arith.constant 0 : index
      %c0_53 = arith.constant 0 : index
      %97 = vector.load %arg2[%c0_51, %c0_52, %c0_53] : memref<1x8x32xf32, #tpu.memory_space<vmem>>, vector<1x8x32xf32>
      %98 = vector.shape_cast %97 : vector<1x8x32xf32> to vector<8x32xf32>
      %c0_54 = arith.constant 0 : index
      %c0_55 = arith.constant 0 : index
      %c0_56 = arith.constant 0 : index
      %99 = vector.load %arg13[%c0_54, %c0_55, %c0_56] : memref<1x8x32xf32, #tpu.memory_space<vmem>>, vector<1x8x32xf32>
      %100 = vector.shape_cast %99 : vector<1x8x32xf32> to vector<8x32xf32>
      %101 = vector.shape_cast %98 : vector<8x32xf32> to vector<1x8x32xf32>
      tpu.vector_store %arg13[%c0_54, %c0_55, %c0_56], %101 {strides = array<i32>} : memref<1x8x32xf32, #tpu.memory_space<vmem>>, vector<1x8x32xf32>,
    } else {
    }
    %c0 = arith.constant 0 : index
    %c0_1 = arith.constant 0 : index
    %c0_2 = arith.constant 0 : index
    %3 = vector.load %arg13[%c0, %c0_1, %c0_2] : memref<1x8x32xf32, #tpu.memory_space<vmem>>, vector<1x8x32xf32>
    %4 = vector.shape_cast %3 : vector<1x8x32xf32> to vector<8x32xf32>
    %5 = arith.truncf %4 : vector<8x32xf32> to vector<8x32xbf16>
    %c0_3 = arith.constant 0 : index
    %c0_4 = arith.constant 0 : index
    %6 = vector.load %arg4[%c0_3, %c0_4] : memref<32x64xbf16, #tpu.memory_space<vmem>>, vector<32x64xbf16>
    %cst = arith.constant dense<0.000000e+00> : vector<8x64xf32>
    %7 = tpu.matmul %5, %6, %cst {dimension_numbers = #tpu.dot_dimension_numbers<[1], [0], [0], [1], [0, 0, 1, 1], [], []>} : vector<8x32xbf16>, vector<32x64xbf16>, vector<8x64xf32> -> vector<8x64xf32>
    %8 = vector.extract_strided_slice %7 {offsets = [0, 0], sizes = [8, 32], strides = [1, 1]} : vector<8x64xf32> to vector<8x32xf32>
    %9 = vector.extract_strided_slice %7 {offsets = [0, 32], sizes = [8, 32], strides = [1, 1]} : vector<8x64xf32> to vector<8x32xf32>
    %cst_5 = arith.constant 0.000000e+00 : f32
    %10 = vector.broadcast %cst_5 : f32 to vector<8x32xf32>
    %11 = arith.subf %10, %9 : vector<8x32xf32>
    %12 = tpu.concatenate %8, %11 in 0 : vector<8x32xf32>, vector<8x32xf32> -> vector<16x32xf32>
    %c0_6 = arith.constant 0 : index
    %c0_7 = arith.constant 0 : index
    %13 = vector.load %arg3[%c0_6, %c0_7] : memref<8x16xbf16, #tpu.memory_space<vmem>>, vector<8x16xbf16>
    %14 = arith.truncf %12 : vector<16x32xf32> to vector<16x32xbf16>
    %cst_8 = arith.constant dense<0.000000e+00> : vector<8x32xf32>
    %15 = tpu.matmul %13, %14, %cst_8 {dimension_numbers = #tpu.dot_dimension_numbers<[1], [0], [0], [1], [0, 0, 1, 1], [], []>} : vector<8x16xbf16>, vector<16x32xbf16>, vector<8x32xf32> -> vector<8x32xf32>
    %16 = arith.addf %15, %4 : vector<8x32xf32>
    %c0_9 = arith.constant 0 : index
    %c0_10 = arith.constant 0 : index
    %c0_11 = arith.constant 0 : index
    %17 = vector.load %arg5[%c0_9, %c0_10, %c0_11] : memref<1x1x32xf32, #tpu.memory_space<vmem>>, vector<1x1x32xf32>
    %18 = vector.shape_cast %17 : vector<1x1x32xf32> to vector<1x32xf32>
    %c0_12 = arith.constant 0 : index
    %c0_13 = arith.constant 0 : index
    %c0_14 = arith.constant 0 : index
    %19 = vector.load %arg6[%c0_12, %c0_13, %c0_14] : memref<1x1x32xf32, #tpu.memory_space<vmem>>, vector<1x1x32xf32>
    %20 = vector.shape_cast %19 : vector<1x1x32xf32> to vector<1x32xf32>
    %cst_15 = arith.constant dense<0.000000e+00> : vector<8xf32>
    %21 = vector.multi_reduction <add>, %16, %cst_15 [1] : vector<8x32xf32> to vector<8xf32>
    %22 = vector.shape_cast %21 : vector<8xf32> to vector<8x1xf32>
    %cst_16 = arith.constant 3.200000e+01 : f32
    %23 = vector.broadcast %cst_16 : f32 to vector<8x1xf32>
    %24 = arith.divf %22, %23 : vector<8x1xf32>
    %25 = vector.broadcast %24 : vector<8x1xf32> to vector<8x32xf32>
    %26 = arith.subf %16, %25 : vector<8x32xf32>
    %27 = arith.mulf %26, %26 : vector<8x32xf32>
    %cst_17 = arith.constant dense<0.000000e+00> : vector<8xf32>
    %28 = vector.multi_reduction <add>, %27, %cst_17 [1] : vector<8x32xf32> to vector<8xf32>
    %29 = vector.shape_cast %28 : vector<8xf32> to vector<8x1xf32>
    %cst_18 = arith.constant 3.200000e+01 : f32
    %30 = vector.broadcast %cst_18 : f32 to vector<8x1xf32>
    %31 = arith.divf %29, %30 : vector<8x1xf32>
    %32 = vector.broadcast %24 : vector<8x1xf32> to vector<8x32xf32>
    %33 = arith.subf %16, %32 : vector<8x32xf32>
    %cst_19 = arith.constant 9.99999996E-13 : f32
    %34 = vector.broadcast %cst_19 : f32 to vector<8x1xf32>
    %35 = arith.addf %31, %34 : vector<8x1xf32>
    %36 = math.rsqrt %35 : vector<8x1xf32>
    %37 = vector.broadcast %36 : vector<8x1xf32> to vector<8x32xf32>
    %38 = arith.mulf %33, %37 : vector<8x32xf32>
    %39 = vector.broadcast %18 : vector<1x32xf32> to vector<8x32xf32>
    %40 = arith.mulf %38, %39 : vector<8x32xf32>
    %41 = vector.broadcast %20 : vector<1x32xf32> to vector<8x32xf32>
    %42 = arith.addf %40, %41 : vector<8x32xf32>
    %43 = arith.truncf %42 : vector<8x32xf32> to vector<8x32xbf16>
    %c0_20 = arith.constant 0 : index
    %c0_21 = arith.constant 0 : index
    %c0_22 = arith.constant 0 : index
    %44 = vector.load %arg7[%c0_20, %c0_21, %c0_22] : memref<1x32x64xbf16, #tpu.memory_space<vmem>>, vector<1x32x64xbf16>
    %45 = vector.shape_cast %44 : vector<1x32x64xbf16> to vector<32x64xbf16>
    %cst_23 = arith.constant dense<0.000000e+00> : vector<8x64xf32>
    %46 = tpu.matmul %43, %45, %cst_23 {dimension_numbers = #tpu.dot_dimension_numbers<[1], [0], [0], [1], [0, 0, 1, 1], [], []>} : vector<8x32xbf16>, vector<32x64xbf16>, vector<8x64xf32> -> vector<8x64xf32>
    %c0_24 = arith.constant 0 : index
    %c0_25 = arith.constant 0 : index
    %c0_26 = arith.constant 0 : index
    %47 = vector.load %arg8[%c0_24, %c0_25, %c0_26] : memref<1x1x64xf32, #tpu.memory_space<vmem>>, vector<1x1x64xf32>
    %48 = vector.shape_cast %47 : vector<1x1x64xf32> to vector<1x64xf32>
    %49 = vector.broadcast %48 : vector<1x64xf32> to vector<8x64xf32>
    %50 = arith.addf %46, %49 : vector<8x64xf32>
    %cst_27 = arith.constant 5.000000e-01 : f32
    %51 = vector.broadcast %cst_27 : f32 to vector<8x64xf32>
    %52 = arith.mulf %51, %50 : vector<8x64xf32>
    %cst_28 = arith.constant 0.707106769 : f32
    %53 = vector.broadcast %cst_28 : f32 to vector<8x64xf32>
    %54 = arith.mulf %50, %53 : vector<8x64xf32>
    %55 = math.erf %54 : vector<8x64xf32>
    %cst_29 = arith.constant 1.000000e+00 : f32
    %56 = vector.broadcast %cst_29 : f32 to vector<8x64xf32>
    %57 = arith.addf %56, %55 : vector<8x64xf32>
    %58 = arith.mulf %52, %57 : vector<8x64xf32>
    %59 = arith.truncf %58 : vector<8x64xf32> to vector<8x64xbf16>
    %c0_30 = arith.constant 0 : index
    %c0_31 = arith.constant 0 : index
    %c0_32 = arith.constant 0 : index
    %60 = vector.load %arg9[%c0_30, %c0_31, %c0_32] : memref<1x64x32xbf16, #tpu.memory_space<vmem>>, vector<1x64x32xbf16>
    %61 = vector.shape_cast %60 : vector<1x64x32xbf16> to vector<64x32xbf16>
    %cst_33 = arith.constant dense<0.000000e+00> : vector<8x32xf32>
    %62 = tpu.matmul %59, %61, %cst_33 {dimension_numbers = #tpu.dot_dimension_numbers<[1], [0], [0], [1], [0, 0, 1, 1], [], []>} : vector<8x64xbf16>, vector<64x32xbf16>, vector<8x32xf32> -> vector<8x32xf32>
    %c0_34 = arith.constant 0 : index
    %c0_35 = arith.constant 0 : index
    %c0_36 = arith.constant 0 : index
    %63 = vector.load %arg10[%c0_34, %c0_35, %c0_36] : memref<1x1x32xf32, #tpu.memory_space<vmem>>, vector<1x1x32xf32>
    %64 = vector.shape_cast %63 : vector<1x1x32xf32> to vector<1x32xf32>
    %65 = vector.broadcast %64 : vector<1x32xf32> to vector<8x32xf32>
    %66 = arith.addf %62, %65 : vector<8x32xf32>
    %67 = arith.addf %66, %42 : vector<8x32xf32>
    %c0_37 = arith.constant 0 : index
    %c0_38 = arith.constant 0 : index
    %c0_39 = arith.constant 0 : index
    %68 = vector.load %arg11[%c0_37, %c0_38, %c0_39] : memref<1x1x32xf32, #tpu.memory_space<vmem>>, vector<1x1x32xf32>
    %69 = vector.shape_cast %68 : vector<1x1x32xf32> to vector<1x32xf32>
    %c0_40 = arith.constant 0 : index
    %c0_41 = arith.constant 0 : index
    %c0_42 = arith.constant 0 : index
    %70 = vector.load %arg12[%c0_40, %c0_41, %c0_42] : memref<1x1x32xf32, #tpu.memory_space<vmem>>, vector<1x1x32xf32>
    %71 = vector.shape_cast %70 : vector<1x1x32xf32> to vector<1x32xf32>
    %cst_43 = arith.constant dense<0.000000e+00> : vector<8xf32>
    %72 = vector.multi_reduction <add>, %67, %cst_43 [1] : vector<8x32xf32> to vector<8xf32>
    %73 = vector.shape_cast %72 : vector<8xf32> to vector<8x1xf32>
    %cst_44 = arith.constant 3.200000e+01 : f32
    %74 = vector.broadcast %cst_44 : f32 to vector<8x1xf32>
    %75 = arith.divf %73, %74 : vector<8x1xf32>
    %76 = vector.broadcast %75 : vector<8x1xf32> to vector<8x32xf32>
    %77 = arith.subf %67, %76 : vector<8x32xf32>
    %78 = arith.mulf %77, %77 : vector<8x32xf32>
    %cst_45 = arith.constant dense<0.000000e+00> : vector<8xf32>
    %79 = vector.multi_reduction <add>, %78, %cst_45 [1] : vector<8x32xf32> to vector<8xf32>
    %80 = vector.shape_cast %79 : vector<8xf32> to vector<8x1xf32>
    %cst_46 = arith.constant 3.200000e+01 : f32
    %81 = vector.broadcast %cst_46 : f32 to vector<8x1xf32>
    %82 = arith.divf %80, %81 : vector<8x1xf32>
    %83 = vector.broadcast %75 : vector<8x1xf32> to vector<8x32xf32>
    %84 = arith.subf %67, %83 : vector<8x32xf32>
    %cst_47 = arith.constant 9.99999996E-13 : f32
    %85 = vector.broadcast %cst_47 : f32 to vector<8x1xf32>
    %86 = arith.addf %82, %85 : vector<8x1xf32>
    %87 = math.rsqrt %86 : vector<8x1xf32>
    %88 = vector.broadcast %87 : vector<8x1xf32> to vector<8x32xf32>
    %89 = arith.mulf %84, %88 : vector<8x32xf32>
    %90 = vector.broadcast %69 : vector<1x32xf32> to vector<8x32xf32>
    %91 = arith.mulf %89, %90 : vector<8x32xf32>
    %92 = vector.broadcast %71 : vector<1x32xf32> to vector<8x32xf32>
    %93 = arith.addf %91, %92 : vector<8x32xf32>
    %c0_48 = arith.constant 0 : index
    %c0_49 = arith.constant 0 : index
    %c0_50 = arith.constant 0 : index
    %94 = vector.load %arg13[%c0_48, %c0_49, %c0_50] : memref<1x8x32xf32, #tpu.memory_space<vmem>>, vector<1x8x32xf32>
    %95 = vector.shape_cast %94 : vector<1x8x32xf32> to vector<8x32xf32>
    %96 = vector.shape_cast %93 : vector<8x32xf32> to vector<1x8x32xf32>
    tpu.vector_store %arg13[%c0_48, %c0_49, %c0_50], %96 {strides = array<i32>} : memref<1x8x32xf32, #tpu.memory_space<vmem>>, vector<1x8x32xf32>,
    return
  }
  func.func @transform_0(%arg0: i32, %arg1: i32) -> (i32, i32, i32) {
    %c0_i32 = arith.constant 0 : i32
    %c0_i32_0 = arith.constant 0 : i32
    %c0_i32_1 = arith.constant 0 : i32
    return %arg0, %c0_i32, %c0_i32_0 : i32, i32, i32
  }
  func.func @transform_1(%arg0: i32, %arg1: i32) -> (i32, i32) {
    %c0_i32 = arith.constant 0 : i32
    %c0_i32_0 = arith.constant 0 : i32
    %c0_i32_1 = arith.constant 0 : i32
    return %c0_i32, %c0_i32_0 : i32, i32
  }
  func.func @transform_2(%arg0: i32, %arg1: i32) -> (i32, i32) {
    %c0_i32 = arith.constant 0 : i32
    %c0_i32_0 = arith.constant 0 : i32
    %c0_i32_1 = arith.constant 0 : i32
    return %c0_i32, %c0_i32_0 : i32, i32
  }
  func.func @transform_3(%arg0: i32, %arg1: i32) -> (i32, i32, i32) {
    %c0_i32 = arith.constant 0 : i32
    %c0_i32_0 = arith.constant 0 : i32
    %c0_i32_1 = arith.constant 0 : i32
    return %arg1, %c0_i32, %c0_i32_0 : i32, i32, i32
  }
  func.func @transform_4(%arg0: i32, %arg1: i32) -> (i32, i32, i32) {
    %c0_i32 = arith.constant 0 : i32
    %c0_i32_0 = arith.constant 0 : i32
    %c0_i32_1 = arith.constant 0 : i32
    return %arg1, %c0_i32, %c0_i32_0 : i32, i32, i32
  }
  func.func @transform_5(%arg0: i32, %arg1: i32) -> (i32, i32, i32) {
    %c0_i32 = arith.constant 0 : i32
    %c0_i32_0 = arith.constant 0 : i32
    %c0_i32_1 = arith.constant 0 : i32
    return %arg1, %c0_i32, %c0_i32_0 : i32, i32, i32
  }
  func.func @transform_6(%arg0: i32, %arg1: i32) -> (i32, i32, i32) {
    %c0_i32 = arith.constant 0 : i32
    %c0_i32_0 = arith.constant 0 : i32
    %c0_i32_1 = arith.constant 0 : i32
    return %arg1, %c0_i32, %c0_i32_0 : i32, i32, i32
  }
  func.func @transform_7(%arg0: i32, %arg1: i32) -> (i32, i32, i32) {
    %c0_i32 = arith.constant 0 : i32
    %c0_i32_0 = arith.constant 0 : i32
    %c0_i32_1 = arith.constant 0 : i32
    return %arg1, %c0_i32, %c0_i32_0 : i32, i32, i32
  }
  func.func @transform_8(%arg0: i32, %arg1: i32) -> (i32, i32, i32) {
    %c0_i32 = arith.constant 0 : i32
    %c0_i32_0 = arith.constant 0 : i32
    %c0_i32_1 = arith.constant 0 : i32
    return %arg1, %c0_i32, %c0_i32_0 : i32, i32, i32
  }
  func.func @transform_9(%arg0: i32, %arg1: i32) -> (i32, i32, i32) {
    %c0_i32 = arith.constant 0 : i32
    %c0_i32_0 = arith.constant 0 : i32
    %c0_i32_1 = arith.constant 0 : i32
    return %arg1, %c0_i32, %c0_i32_0 : i32, i32, i32
  }
  func.func @transform_10(%arg0: i32, %arg1: i32) -> (i32, i32, i32) {
    %c0_i32 = arith.constant 0 : i32
    %c0_i32_0 = arith.constant 0 : i32
    %c0_i32_1 = arith.constant 0 : i32
    return %arg1, %c0_i32, %c0_i32_0 : i32, i32, i32
  }
  func.func @transform_11(%arg0: i32, %arg1: i32) -> (i32, i32, i32) {
    %c0_i32 = arith.constant 0 : i32
    %c0_i32_0 = arith.constant 0 : i32
    %c0_i32_1 = arith.constant 0 : i32
    return %arg0, %c0_i32, %c0_i32_0 : i32, i32, i32
  }
}

module attributes {stable_mosaic.version = 11 : i64} {
  func.func @mlm_kernel(%arg0: i32, %arg1: i32, %arg2: memref<16x32xf32, #tpu.memory_space<vmem>>, %arg3: memref<32x32xbf16, #tpu.memory_space<vmem>>, %arg4: memref<1x32xf32, #tpu.memory_space<vmem>>, %arg5: memref<1x32xf32, #tpu.memory_space<vmem>>, %arg6: memref<1x32xf32, #tpu.memory_space<vmem>>, %arg7: memref<32x64xbf16, #tpu.memory_space<vmem>>, %arg8: memref<1x64xf32, #tpu.memory_space<vmem>>, %arg9: memref<16x64xf32, #tpu.memory_space<vmem>>, %arg10: memref<16x32xbf16, #tpu.memory_space<vmem>>) attributes {dimension_semantics = [#tpu.dimension_semantics<parallel>, #tpu.dimension_semantics<arbitrary>], iteration_bounds = array<i64: 1, 1>, scalar_prefetch = 0 : i64, scratch_operands = 1 : i64, tpu.core_type = #tpu.core_type<tc>, window_params = [{transform_indices = @transform_0, window_bounds = array<i64: 16, 32>}, {pipeline_mode = #tpu.pipeline_mode<synchronous>, transform_indices = @transform_1, window_bounds = array<i64: 32, 32>}, {pipeline_mode = #tpu.pipeline_mode<synchronous>, transform_indices = @transform_2, window_bounds = array<i64: 1, 32>}, {pipeline_mode = #tpu.pipeline_mode<synchronous>, transform_indices = @transform_3, window_bounds = array<i64: 1, 32>}, {pipeline_mode = #tpu.pipeline_mode<synchronous>, transform_indices = @transform_4, window_bounds = array<i64: 1, 32>}, {transform_indices = @transform_5, window_bounds = array<i64: 32, 64>}, {transform_indices = @transform_6, window_bounds = array<i64: 1, 64>}, {transform_indices = @transform_7, window_bounds = array<i64: 16, 64>}]} {
    %c0_i32 = arith.constant 0 : i32
    %0 = arith.cmpi eq, %arg1, %c0_i32 : i32
    %1 = arith.extui %0 : i1 to i32
    %c0_i32_0 = arith.constant 0 : i32
    %2 = arith.cmpi ne, %1, %c0_i32_0 : i32
    scf.if %2 {
      %c0_8 = arith.constant 0 : index
      %c0_9 = arith.constant 0 : index
      %10 = vector.load %arg2[%c0_8, %c0_9] : memref<16x32xf32, #tpu.memory_space<vmem>>, vector<16x32xf32>
      %11 = arith.truncf %10 : vector<16x32xf32> to vector<16x32xbf16>
      %c0_10 = arith.constant 0 : index
      %c0_11 = arith.constant 0 : index
      %12 = vector.load %arg3[%c0_10, %c0_11] : memref<32x32xbf16, #tpu.memory_space<vmem>>, vector<32x32xbf16>
      %cst_12 = arith.constant dense<0.000000e+00> : vector<16x32xf32>
      %13 = tpu.matmul %11, %12, %cst_12 {dimension_numbers = #tpu.dot_dimension_numbers<[1], [0], [0], [1], [0, 0, 1, 1], [], []>} : vector<16x32xbf16>, vector<32x32xbf16>, vector<16x32xf32> -> vector<16x32xf32>
      %c0_13 = arith.constant 0 : index
      %c0_14 = arith.constant 0 : index
      %14 = vector.load %arg4[%c0_13, %c0_14] : memref<1x32xf32, #tpu.memory_space<vmem>>, vector<1x32xf32>
      %15 = vector.broadcast %14 : vector<1x32xf32> to vector<16x32xf32>
      %16 = arith.addf %13, %15 : vector<16x32xf32>
      %cst_15 = arith.constant 5.000000e-01 : f32
      %17 = vector.broadcast %cst_15 : f32 to vector<16x32xf32>
      %18 = arith.mulf %17, %16 : vector<16x32xf32>
      %cst_16 = arith.constant 0.707106769 : f32
      %19 = vector.broadcast %cst_16 : f32 to vector<16x32xf32>
      %20 = arith.mulf %16, %19 : vector<16x32xf32>
      %21 = math.erf %20 : vector<16x32xf32>
      %cst_17 = arith.constant 1.000000e+00 : f32
      %22 = vector.broadcast %cst_17 : f32 to vector<16x32xf32>
      %23 = arith.addf %22, %21 : vector<16x32xf32>
      %24 = arith.mulf %18, %23 : vector<16x32xf32>
      %c0_18 = arith.constant 0 : index
      %c0_19 = arith.constant 0 : index
      %25 = vector.load %arg5[%c0_18, %c0_19] : memref<1x32xf32, #tpu.memory_space<vmem>>, vector<1x32xf32>
      %c0_20 = arith.constant 0 : index
      %c0_21 = arith.constant 0 : index
      %26 = vector.load %arg6[%c0_20, %c0_21] : memref<1x32xf32, #tpu.memory_space<vmem>>, vector<1x32xf32>
      %cst_22 = arith.constant dense<0.000000e+00> : vector<16xf32>
      %27 = vector.multi_reduction <add>, %24, %cst_22 [1] : vector<16x32xf32> to vector<16xf32>
      %28 = vector.shape_cast %27 : vector<16xf32> to vector<16x1xf32>
      %cst_23 = arith.constant 3.200000e+01 : f32
      %29 = vector.broadcast %cst_23 : f32 to vector<16x1xf32>
      %30 = arith.divf %28, %29 : vector<16x1xf32>
      %31 = vector.broadcast %30 : vector<16x1xf32> to vector<16x32xf32>
      %32 = arith.subf %24, %31 : vector<16x32xf32>
      %33 = arith.mulf %32, %32 : vector<16x32xf32>
      %cst_24 = arith.constant dense<0.000000e+00> : vector<16xf32>
      %34 = vector.multi_reduction <add>, %33, %cst_24 [1] : vector<16x32xf32> to vector<16xf32>
      %35 = vector.shape_cast %34 : vector<16xf32> to vector<16x1xf32>
      %cst_25 = arith.constant 3.200000e+01 : f32
      %36 = vector.broadcast %cst_25 : f32 to vector<16x1xf32>
      %37 = arith.divf %35, %36 : vector<16x1xf32>
      %38 = vector.broadcast %30 : vector<16x1xf32> to vector<16x32xf32>
      %39 = arith.subf %24, %38 : vector<16x32xf32>
      %cst_26 = arith.constant 9.99999974E-6 : f32
      %40 = vector.broadcast %cst_26 : f32 to vector<16x1xf32>
      %41 = arith.addf %37, %40 : vector<16x1xf32>
      %42 = math.rsqrt %41 : vector<16x1xf32>
      %43 = vector.broadcast %42 : vector<16x1xf32> to vector<16x32xf32>
      %44 = arith.mulf %39, %43 : vector<16x32xf32>
      %45 = vector.broadcast %25 : vector<1x32xf32> to vector<16x32xf32>
      %46 = arith.mulf %44, %45 : vector<16x32xf32>
      %47 = vector.broadcast %26 : vector<1x32xf32> to vector<16x32xf32>
      %48 = arith.addf %46, %47 : vector<16x32xf32>
      %49 = arith.truncf %48 : vector<16x32xf32> to vector<16x32xbf16>
      %c0_27 = arith.constant 0 : index
      %c0_28 = arith.constant 0 : index
      %50 = vector.load %arg10[%c0_27, %c0_28] : memref<16x32xbf16, #tpu.memory_space<vmem>>, vector<16x32xbf16>
      tpu.vector_store %arg10[%c0_27, %c0_28], %49 {strides = array<i32>} : memref<16x32xbf16, #tpu.memory_space<vmem>>, vector<16x32xbf16>,
    } else {
    }
    %c0 = arith.constant 0 : index
    %c0_1 = arith.constant 0 : index
    %3 = vector.load %arg10[%c0, %c0_1] : memref<16x32xbf16, #tpu.memory_space<vmem>>, vector<16x32xbf16>
    %c0_2 = arith.constant 0 : index
    %c0_3 = arith.constant 0 : index
    %4 = vector.load %arg7[%c0_2, %c0_3] : memref<32x64xbf16, #tpu.memory_space<vmem>>, vector<32x64xbf16>
    %cst = arith.constant dense<0.000000e+00> : vector<16x64xf32>
    %5 = tpu.matmul %3, %4, %cst {dimension_numbers = #tpu.dot_dimension_numbers<[1], [0], [0], [1], [0, 0, 1, 1], [], []>} : vector<16x32xbf16>, vector<32x64xbf16>, vector<16x64xf32> -> vector<16x64xf32>
    %c0_4 = arith.constant 0 : index
    %c0_5 = arith.constant 0 : index
    %6 = vector.load %arg8[%c0_4, %c0_5] : memref<1x64xf32, #tpu.memory_space<vmem>>, vector<1x64xf32>
    %7 = vector.broadcast %6 : vector<1x64xf32> to vector<16x64xf32>
    %8 = arith.addf %5, %7 : vector<16x64xf32>
    %c0_6 = arith.constant 0 : index
    %c0_7 = arith.constant 0 : index
    %9 = vector.load %arg9[%c0_6, %c0_7] : memref<16x64xf32, #tpu.memory_space<vmem>>, vector<16x64xf32>
    tpu.vector_store %arg9[%c0_6, %c0_7], %8 {strides = array<i32>} : memref<16x64xf32, #tpu.memory_space<vmem>>, vector<16x64xf32>,
    return
  }
  func.func @transform_0(%arg0: i32, %arg1: i32) -> (i32, i32) {
    %c0_i32 = arith.constant 0 : i32
    %c0_i32_0 = arith.constant 0 : i32
    return %arg0, %c0_i32 : i32, i32
  }
  func.func @transform_1(%arg0: i32, %arg1: i32) -> (i32, i32) {
    %c0_i32 = arith.constant 0 : i32
    %c0_i32_0 = arith.constant 0 : i32
    %c0_i32_1 = arith.constant 0 : i32
    return %c0_i32, %c0_i32_0 : i32, i32
  }
  func.func @transform_2(%arg0: i32, %arg1: i32) -> (i32, i32) {
    %c0_i32 = arith.constant 0 : i32
    %c0_i32_0 = arith.constant 0 : i32
    %c0_i32_1 = arith.constant 0 : i32
    return %c0_i32, %c0_i32_0 : i32, i32
  }
  func.func @transform_3(%arg0: i32, %arg1: i32) -> (i32, i32) {
    %c0_i32 = arith.constant 0 : i32
    %c0_i32_0 = arith.constant 0 : i32
    %c0_i32_1 = arith.constant 0 : i32
    return %c0_i32, %c0_i32_0 : i32, i32
  }
  func.func @transform_4(%arg0: i32, %arg1: i32) -> (i32, i32) {
    %c0_i32 = arith.constant 0 : i32
    %c0_i32_0 = arith.constant 0 : i32
    %c0_i32_1 = arith.constant 0 : i32
    return %c0_i32, %c0_i32_0 : i32, i32
  }
  func.func @transform_5(%arg0: i32, %arg1: i32) -> (i32, i32) {
    %c0_i32 = arith.constant 0 : i32
    %c0_i32_0 = arith.constant 0 : i32
    return %c0_i32, %arg1 : i32, i32
  }
  func.func @transform_6(%arg0: i32, %arg1: i32) -> (i32, i32) {
    %c0_i32 = arith.constant 0 : i32
    %c0_i32_0 = arith.constant 0 : i32
    return %c0_i32, %arg1 : i32, i32
  }
  func.func @transform_7(%arg0: i32, %arg1: i32) -> (i32, i32) {
    %c0_i32 = arith.constant 0 : i32
    return %arg0, %arg1 : i32, i32
  }
}

module attributes {stable_mosaic.version = 11 : i64} {
  func.func @pool_nsp_kernel(%arg0: memref<2x32xf32, #tpu.memory_space<vmem>>, %arg1: memref<32x32xbf16, #tpu.memory_space<vmem>>, %arg2: memref<1x32xf32, #tpu.memory_space<vmem>>, %arg3: memref<32x128xbf16, #tpu.memory_space<vmem>>, %arg4: memref<1x128xf32, #tpu.memory_space<vmem>>, %arg5: memref<2x128xf32, #tpu.memory_space<vmem>>) attributes {dimension_semantics = [], scalar_prefetch = 0 : i64, scratch_operands = 0 : i64, tpu.core_type = #tpu.core_type<tc>} {
    %c0 = arith.constant 0 : index
    %c0_0 = arith.constant 0 : index
    %0 = vector.load %arg0[%c0, %c0_0] : memref<2x32xf32, #tpu.memory_space<vmem>>, vector<2x32xf32>
    %1 = arith.truncf %0 : vector<2x32xf32> to vector<2x32xbf16>
    %c0_1 = arith.constant 0 : index
    %c0_2 = arith.constant 0 : index
    %2 = vector.load %arg1[%c0_1, %c0_2] : memref<32x32xbf16, #tpu.memory_space<vmem>>, vector<32x32xbf16>
    %cst = arith.constant dense<0.000000e+00> : vector<2x32xf32>
    %3 = tpu.matmul %1, %2, %cst {dimension_numbers = #tpu.dot_dimension_numbers<[1], [0], [0], [1], [0, 0, 1, 1], [], []>} : vector<2x32xbf16>, vector<32x32xbf16>, vector<2x32xf32> -> vector<2x32xf32>
    %c0_3 = arith.constant 0 : index
    %c0_4 = arith.constant 0 : index
    %4 = vector.load %arg2[%c0_3, %c0_4] : memref<1x32xf32, #tpu.memory_space<vmem>>, vector<1x32xf32>
    %5 = vector.broadcast %4 : vector<1x32xf32> to vector<2x32xf32>
    %6 = arith.addf %3, %5 : vector<2x32xf32>
    %7 = math.tanh %6 : vector<2x32xf32>
    %8 = arith.truncf %7 : vector<2x32xf32> to vector<2x32xbf16>
    %c0_5 = arith.constant 0 : index
    %c0_6 = arith.constant 0 : index
    %9 = vector.load %arg3[%c0_5, %c0_6] : memref<32x128xbf16, #tpu.memory_space<vmem>>, vector<32x128xbf16>
    %cst_7 = arith.constant dense<0.000000e+00> : vector<2x128xf32>
    %10 = tpu.matmul %8, %9, %cst_7 {dimension_numbers = #tpu.dot_dimension_numbers<[1], [0], [0], [1], [0, 0, 1, 1], [], []>} : vector<2x32xbf16>, vector<32x128xbf16>, vector<2x128xf32> -> vector<2x128xf32>
    %c0_8 = arith.constant 0 : index
    %c0_9 = arith.constant 0 : index
    %11 = vector.load %arg4[%c0_8, %c0_9] : memref<1x128xf32, #tpu.memory_space<vmem>>, vector<1x128xf32>
    %12 = vector.broadcast %11 : vector<1x128xf32> to vector<2x128xf32>
    %13 = arith.addf %10, %12 : vector<2x128xf32>
    %c0_10 = arith.constant 0 : index
    %c0_11 = arith.constant 0 : index
    %14 = vector.load %arg5[%c0_10, %c0_11] : memref<2x128xf32, #tpu.memory_space<vmem>>, vector<2x128xf32>
    tpu.vector_store %arg5[%c0_10, %c0_11], %13 {strides = array<i32>} : memref<2x128xf32, #tpu.memory_space<vmem>>, vector<2x128xf32>,
    return
  }
}

</mosaic_0001>

<llo_original>
// kernel: fwd.4
$region0: #{fwd.4}
  #allocation0 [shape = 'u32[]', space=smem, size = 0x4, offset = 0x4, fixed_abs, tag = 'smem constant byte address 0x4 - core index']
  #allocation1 [shape = 'u32[144,128]{1,0:T(1,128)}', space=vmem, size = 0x12000, scoped, tag = 'internal scratch']
  %s0 = inlined_call_operand.vmem [shape: f32[16,32], index: 0, kind: input, shape index: {}]
  %s1 = inlined_call_operand.vmem [shape: f32[1,32], index: 1, kind: input, shape index: {}]
  %s2 = inlined_call_operand.vmem [shape: f32[1,32], index: 2, kind: input, shape index: {}]
  %s3 = inlined_call_operand.vmem [shape: bf16[32,32], index: 3, kind: input, shape index: {}]
  %s4 = inlined_call_operand.vmem [shape: f32[1,32], index: 4, kind: input, shape index: {}]
  %s5 = inlined_call_operand.vmem [shape: f32[16,32], index: 5, kind: output, shape index: {}]
  %s6 = sld [smem:[#allocation0]]
  $region30: #{fwd.4} parent=0
    _
  %s8 = ssub.s32 1, %s6
  %s9 = scalar_select 0, %s8, %s6
  // Predicated region
  $region2: #{fwd.4} parent=0 // pred_check
    _
  $region3: #{fwd.4} parent=0 // pred_check_branch
    %11 = sbr.rel (0) target = $region5
  $region4: #{fwd.4} parent=0 // pred_region
    _
  $region5: #{fwd.4} parent=0 // pred_fallthru
    _
  // Predicated region
  $region6: #{fwd.4} parent=0 // pred_check
    _
  $region7: #{fwd.4} parent=0 // pred_check_branch
    %13 = sbr.rel (0) target = $region9
  $region8: #{fwd.4} parent=0 // pred_region
    _
  $region9: #{fwd.4} parent=0 // pred_fallthru
    _
  // Predicated region
  $region10: #{fwd.4} parent=0 // pred_check
    _
  $region11: #{fwd.4} parent=0 // pred_check_branch
    %15 = sbr.rel (0) target = $region13
  $region12: #{fwd.4} parent=0 // pred_region
    _
  $region13: #{fwd.4} parent=0 // pred_fallthru
    _
  // Predicated region
  $region14: #{fwd.4} parent=0 // pred_check
    _
  $region15: #{fwd.4} parent=0 // pred_check_branch
    %17 = sbr.rel (0) target = $region17
  $region16: #{fwd.4} parent=0 // pred_region
    _
  $region17: #{fwd.4} parent=0 // pred_fallthru
    _
  // Predicated region
  $region18: #{fwd.4} parent=0 // pred_check
    _
  $region19: #{fwd.4} parent=0 // pred_check_branch
    %19 = sbr.rel (0) target = $region21
  $region20: #{fwd.4} parent=0 // pred_region
    _
  $region21: #{fwd.4} parent=0 // pred_fallthru
    _
  %v21 = vld [vmem:[%s0] sm:$0xff]
  %v22 = vld [vmem:[%s0 + $0x8] sm:$0xff]
  %v23 = vld [vmem:[%s1] sm:$0x1]
  %v24 = vld [vmem:[%s2] sm:$0x1]
  %vm25 = vcmask 261120
  %v26 = vsel %vm25, %v21, 0.0
  %27 = vadd.xlane.f32.xlu0 %v26
  %v28 = vpop.xlane.xlu0 %27
  %v29 = vsel %vm25, %v22, 0.0
  %30 = vadd.xlane.f32.xlu0 %v29
  %v31 = vpop.xlane.xlu0 %30
  %v32 = vrcp.pop 32.0
  %v33 = vmul.f32 %v28, %v32
  %v34 = vmul.f32 %v31, %v32
  %v35 = vsub.f32 %v21, %v33
  %v36 = vsub.f32 %v22, %v34
  %v37 = vmul.f32 %v35, %v35
  %v38 = vmul.f32 %v36, %v36
  %v39 = vsel %vm25, %v37, 0.0
  %40 = vadd.xlane.f32.xlu0 %v39
  %v41 = vpop.xlane.xlu0 %40
  %v42 = vsel %vm25, %v38, 0.0
  %43 = vadd.xlane.f32.xlu0 %v42
  %v44 = vpop.xlane.xlu0 %43
  %v45 = vmul.f32 %v41, %v32
  %v46 = vmul.f32 %v44, %v32
  %v47 = vadd.f32 %v45, 1e-12
  %v48 = vadd.f32 %v46, 1e-12
  %v49 = vrsqrt.pop %v47
  %v50 = vrsqrt.pop %v48
  %v51 = vmul.f32 %v35, %v49
  %v52 = vmul.f32 %v36, %v50
  %v54 = vlaneseq
  %v55 = vshrl.u32 %v54, 7
  %v56 = vsub.s32 0, %v55
  %v57 = vrot.slane %v23, %v56
  %v59 = vmul.f32 %v51, %v57
  %v60 = vmul.f32 %v52, %v57
  %v62 = vlaneseq
  %v63 = vshrl.u32 %v62, 7
  %v64 = vsub.s32 0, %v63
  %v65 = vrot.slane %v24, %v64
  %v67 = vadd.f32 %v59, %v65
  %v68 = vadd.f32 %v60, %v65
  %v69 = vpack.c.bf16 %v68, %v67
  %v70 = vld [vmem:[%s3] sm:$0xf]
  %v71 = vld [vmem:[%s3 + $0x4] sm:$0xf]
  %v72 = vld [vmem:[%s3 + $0x8] sm:$0xf]
  %v73 = vld [vmem:[%s3 + $0xc] sm:$0xf]
  %v74 = vld [vmem:[%s4] sm:$0x1]
  %v76 = vlaneseq
  %v77 = vshrl.u32 %v76, 7
  %v78 = vsub.s32 0, %v77
  %v79 = vrot.slane %v74, %v78
  %v85 = vunpack.c.l.b16 %v70
  %v86 = vunpack.c.l.b16 %v71
  %v87 = vunpack.c.l.b16 %v72
  %v88 = vunpack.c.l.b16 %v73
  %v89 = vpack.c.b16 %v86, %v85
  %v90 = vpack.c.b16 %v88, %v87
  %v94 = vsel %vm25, %v69, 0
  %96 = vmatprep.subr.bf16.mxu0 0
  %97 = vmatpush1.bf16.msra.mxu0 0
  %98 = vmatprep.subr.bf16.mxu0 0
  %99 = vmatpush1.bf16.msra.mxu0 0
  %100 = vmatprep.subr.bf16.mxu0 0
  %101 = vmatpush1.bf16.msra.mxu0 0
  %102 = vmatprep.subr.bf16.mxu0 0
  %103 = vmatpush1.bf16.msra.mxu0 0
  %104 = vmatprep.subr.bf16.mxu0 0
  %105 = vmatpush1.bf16.msra.mxu0 0
  %106 = vmatprep.subr.bf16.mxu0 0
  %107 = vmatpush1.bf16.msra.mxu0 0
  %108 = vmatprep.subr.bf16.mxu0 0
  %109 = vmatpush1.bf16.msra.mxu0 %v90
  %110 = vmatprep.subr.bf16.mxu0 0
  %111 = vmatpush1.bf16.msra.mxu0 %v89
  %112 = vmatprep.subr.bf16.mxu0 0
  %113 = vmatpush2.bf16.msra.mxu0 0
  %114 = vmatprep.subr.bf16.mxu0 0
  %115 = vmatpush2.bf16.msra.mxu0 0
  %116 = vmatprep.subr.bf16.mxu0 0
  %117 = vmatpush2.bf16.msra.mxu0 0
  %118 = vmatprep.subr.bf16.mxu0 0
  %119 = vmatpush2.bf16.msra.mxu0 0
  %120 = vmatprep.subr.bf16.mxu0 0
  %121 = vmatpush2.bf16.msra.mxu0 0
  %122 = vmatprep.subr.bf16.mxu0 0
  %123 = vmatpush2.bf16.msra.mxu0 0
  %124 = vmatprep.subr.bf16.mxu0 0
  %125 = vmatpush2.bf16.msra.mxu0 0
  %126 = vmatprep.subr.bf16.mxu0 0
  %127 = vmatpush2.bf16.msra.mxu0 0
  %128 = vmatprep.mubr.bf16.mxu0 0
  %129 = vmatmul.mubr.bf16.gmra.mxu0 %v94
  %v130 = vpop.f32.mrf.mxu0
  %v131 = vadd.f32 %v79, %v130
  %v132 = vpop.f32.mrf.mxu0
  %v133 = vpop.f32.mrf.mxu0
  %v134 = vadd.f32 %v79, %v133
  %v135 = vpop.f32.mrf.mxu0
  %136 = vdwg.mxu0
  %137 = vst.msk [vmem:[%s5] sm:$0xff] %vm25, %v131
  %138 = vst.msk [vmem:[%s5 + $0x8] sm:$0xff] %vm25, %v134
  // Predicated region
  $region22: #{fwd.4} parent=0 // pred_check
    _
  $region23: #{fwd.4} parent=0 // pred_check_branch
    %140 = sbr.rel (0) target = $region25
  $region24: #{fwd.4} parent=0 // pred_region
    _
  $region25: #{fwd.4} parent=0 // pred_fallthru
    _
  // Predicated region
  $region26: #{fwd.4} parent=0 // pred_check
    _
  $region27: #{fwd.4} parent=0 // pred_check_branch
    %142 = sbr.rel (0) target = $region29
  $region28: #{fwd.4} parent=0 // pred_region
    _
  $region29: #{fwd.4} parent=0 // pred_fallthru
    _

// kernel: fwd.7
$region0: #{fwd.7}
  #allocation0 [shape = 'u32[]', space=smem, size = 0x4, offset = 0x4, fixed_abs, tag = 'smem constant byte address 0x4 - core index']
  #allocation1 [shape = 'u32[144,128]{1,0:T(1,128)}', space=vmem, size = 0x12000, scoped, tag = 'internal scratch']
  %s0 = inlined_call_operand.vmem [shape: f32[2,32], index: 0, kind: input, shape index: {}]
  %s1 = inlined_call_operand.vmem [shape: bf16[32,32], index: 1, kind: input, shape index: {}]
  %s2 = inlined_call_operand.vmem [shape: f32[1,32], index: 2, kind: input, shape index: {}]
  %s3 = inlined_call_operand.vmem [shape: bf16[32,128], index: 3, kind: input, shape index: {}]
  %s4 = inlined_call_operand.vmem [shape: f32[1,128], index: 4, kind: input, shape index: {}]
  %s5 = inlined_call_operand.hbm [shape: f32[2,128], index: 5, kind: output, shape index: {}]
  %s6 = sld [smem:[#allocation0]]
  $region30: #{fwd.7} parent=0
    _
  %s8 = ssub.s32 1, %s6
  %s9 = scalar_select 0, %s8, %s6
  $region1: #{fwd.7} parent=0
    #allocation2 [shape = 'u8[1024]{0}', space=vmem, size = 0x400, scoped, tag = 'output window, operand 0, single buffered']
    #allocation3 [shape = 's32[1]{0}', space=sflag, size = 0x4, scoped, tag = 'scoped memory for fwd.7']
    %10 = vsyncpa [#allocation3], 0
    // Predicated region
    $region2: #{fwd.7} parent=1 // pred_check
      _
    $region3: #{fwd.7} parent=1 // pred_check_branch
      %12 = sbr.rel (0) target = $region5
    $region4: #{fwd.7} parent=1 // pred_region
      _
    $region5: #{fwd.7} parent=1 // pred_fallthru
      _
    // Predicated region
    $region6: #{fwd.7} parent=1 // pred_check
      _
    $region7: #{fwd.7} parent=1 // pred_check_branch
      %14 = sbr.rel (0) target = $region9
    $region8: #{fwd.7} parent=1 // pred_region
      _
    $region9: #{fwd.7} parent=1 // pred_fallthru
      _
    // Predicated region
    $region10: #{fwd.7} parent=1 // pred_check
      _
    $region11: #{fwd.7} parent=1 // pred_check_branch
      %16 = sbr.rel (0) target = $region13
    $region12: #{fwd.7} parent=1 // pred_region
      _
    $region13: #{fwd.7} parent=1 // pred_fallthru
      _
    // Predicated region
    $region14: #{fwd.7} parent=1 // pred_check
      _
    $region15: #{fwd.7} parent=1 // pred_check_branch
      %18 = sbr.rel (0) target = $region17
    $region16: #{fwd.7} parent=1 // pred_region
      _
    $region17: #{fwd.7} parent=1 // pred_fallthru
      _
    // Predicated region
    $region18: #{fwd.7} parent=1 // pred_check
      _
    $region19: #{fwd.7} parent=1 // pred_check_branch
      %20 = sbr.rel (0) target = $region21
    $region20: #{fwd.7} parent=1 // pred_region
      _
    $region21: #{fwd.7} parent=1 // pred_fallthru
      _
    %v22 = vld [vmem:[%s0] sm:$0x3]
    %v23 = vpack.c.bf16 %v22, %v22
    %v24 = vld [vmem:[%s1] sm:$0xf]
    %v25 = vld [vmem:[%s1 + $0x4] sm:$0xf]
    %v26 = vld [vmem:[%s1 + $0x8] sm:$0xf]
    %v27 = vld [vmem:[%s1 + $0xc] sm:$0xf]
    %v28 = vld [vmem:[%s2] sm:$0x1]
    %v30 = vlaneseq
    %v31 = vshrl.u32 %v30, 7
    %v32 = vsub.s32 0, %v31
    %v33 = vrot.slane %v28, %v32
    %v39 = vunpack.c.l.b16 %v24
    %v40 = vunpack.c.l.b16 %v25
    %v41 = vunpack.c.l.b16 %v26
    %v42 = vunpack.c.l.b16 %v27
    %v43 = vpack.c.b16 %v40, %v39
    %v44 = vpack.c.b16 %v42, %v41
    %vm47 = vcmask 261120
    %v49 = vsel %vm47, %v23, 0
    %51 = vmatprep.subr.bf16.mxu0 0
    %52 = vmatpush1.bf16.msra.mxu0 0
    %53 = vmatprep.subr.bf16.mxu0 0
    %54 = vmatpush1.bf16.msra.mxu0 0
    %55 = vmatprep.subr.bf16.mxu0 0
    %56 = vmatpush1.bf16.msra.mxu0 0
    %57 = vmatprep.subr.bf16.mxu0 0
    %58 = vmatpush1.bf16.msra.mxu0 0
    %59 = vmatprep.subr.bf16.mxu0 0
    %60 = vmatpush1.bf16.msra.mxu0 0
    %61 = vmatprep.subr.bf16.mxu0 0
    %62 = vmatpush1.bf16.msra.mxu0 0
    %63 = vmatprep.subr.bf16.mxu0 0
    %64 = vmatpush1.bf16.msra.mxu0 %v44
    %65 = vmatprep.subr.bf16.mxu0 0
    %66 = vmatpush1.bf16.msra.mxu0 %v43
    %67 = vmatprep.subr.bf16.mxu0 0
    %68 = vmatpush2.bf16.msra.mxu0 0
    %69 = vmatprep.subr.bf16.mxu0 0
    %70 = vmatpush2.bf16.msra.mxu0 0
    %71 = vmatprep.subr.bf16.mxu0 0
    %72 = vmatpush2.bf16.msra.mxu0 0
    %73 = vmatprep.subr.bf16.mxu0 0
    %74 = vmatpush2.bf16.msra.mxu0 0
    %75 = vmatprep.subr.bf16.mxu0 0
    %76 = vmatpush2.bf16.msra.mxu0 0
    %77 = vmatprep.subr.bf16.mxu0 0
    %78 = vmatpush2.bf16.msra.mxu0 0
    %79 = vmatprep.subr.bf16.mxu0 0
    %80 = vmatpush2.bf16.msra.mxu0 0
    %81 = vmatprep.subr.bf16.mxu0 0
    %82 = vmatpush2.bf16.msra.mxu0 0
    %83 = vmatprep.mubr.bf16.mxu0 0
    %84 = vmatmul.mubr.bf16.gmra.mxu0 %v49
    %v85 = vpop.f32.mrf.mxu0
    %v86 = vadd.f32 %v33, %v85
    %v87 = vpop.f32.mrf.mxu0
    %v88 = vpop.f32.mrf.mxu0
    %v89 = vpop.f32.mrf.mxu0
    %90 = vdwg.mxu0
    %v91 = vtanh.pop %v86
    %v92 = vpack.c.bf16 %v91, %v91
    %v93 = vld [vmem:[%s3] sm:$0xf]
    %v94 = vld [vmem:[%s3 + $0x4] sm:$0xf]
    %v95 = vld [vmem:[%s3 + $0x8] sm:$0xf]
    %v96 = vld [vmem:[%s3 + $0xc] sm:$0xf]
    %v97 = vld [vmem:[%s4] sm:$0x1]
    %v99 = vlaneseq
    %v100 = vshrl.u32 %v99, 7
    %v101 = vsub.s32 0, %v100
    %v102 = vrot.slane %v97, %v101
    %v108 = vunpack.c.l.b16 %v93
    %v109 = vunpack.c.l.b16 %v94
    %v110 = vunpack.c.l.b16 %v95
    %v111 = vunpack.c.l.b16 %v96
    %v112 = vpack.c.b16 %v109, %v108
    %v113 = vpack.c.b16 %v111, %v110
    %v117 = vsel %vm47, %v92, 0
    %119 = vmatprep.subr.bf16.mxu0 0
    %120 = vmatpush1.bf16.msra.mxu0 0
    %121 = vmatprep.subr.bf16.mxu0 0
    %122 = vmatpush1.bf16.msra.mxu0 0
    %123 = vmatprep.subr.bf16.mxu0 0
    %124 = vmatpush1.bf16.msra.mxu0 0
    %125 = vmatprep.subr.bf16.mxu0 0
    %126 = vmatpush1.bf16.msra.mxu0 0
    %127 = vmatprep.subr.bf16.mxu0 0
    %128 = vmatpush1.bf16.msra.mxu0 0
    %129 = vmatprep.subr.bf16.mxu0 0
    %130 = vmatpush1.bf16.msra.mxu0 0
    %131 = vmatprep.subr.bf16.mxu0 0
    %132 = vmatpush1.bf16.msra.mxu0 %v113
    %133 = vmatprep.subr.bf16.mxu0 0
    %134 = vmatpush1.bf16.msra.mxu0 %v112
    %135 = vmatprep.subr.bf16.mxu0 0
    %136 = vmatpush2.bf16.msra.mxu0 0
    %137 = vmatprep.subr.bf16.mxu0 0
    %138 = vmatpush2.bf16.msra.mxu0 0
    %139 = vmatprep.subr.bf16.mxu0 0
    %140 = vmatpush2.bf16.msra.mxu0 0
    %141 = vmatprep.subr.bf16.mxu0 0
    %142 = vmatpush2.bf16.msra.mxu0 0
    %143 = vmatprep.subr.bf16.mxu0 0
    %144 = vmatpush2.bf16.msra.mxu0 0
    %145 = vmatprep.subr.bf16.mxu0 0
    %146 = vmatpush2.bf16.msra.mxu0 0
    %147 = vmatprep.subr.bf16.mxu0 0
    %148 = vmatpush2.bf16.msra.mxu0 0
    %149 = vmatprep.subr.bf16.mxu0 0
    %150 = vmatpush2.bf16.msra.mxu0 0
    %151 = vmatprep.mubr.bf16.mxu0 0
    %152 = vmatmul.mubr.bf16.gmra.mxu0 %v117
    %v153 = vpop.f32.mrf.mxu0
    %v154 = vadd.f32 %v102, %v153
    %v155 = vpop.f32.mrf.mxu0
    %v156 = vpop.f32.mrf.mxu0
    %v157 = vpop.f32.mrf.mxu0
    %158 = vdwg.mxu0
    %159 = vst [vmem:[#allocation2] sm:$0x3] %v154
    // Predicated region
    $region22: #{fwd.7} parent=1 // pred_check
      _
    $region23: #{fwd.7} parent=1 // pred_check_branch
      %161 = sbr.rel (0) target = $region25
    $region24: #{fwd.7} parent=1 // pred_region
      %s163 = ssub.s32 32, 32
      %164 = vsyncadd [#allocation3], %s163
      %s166 = sshll.u32 [#allocation2], 4
      %s167 = int_to_ptr.vmem [resolvable:$true] %s166
      %169 = dma.vmem_to_hbm [thread:$0]  %s167, 32, %s5, [#allocation3]
    $region25: #{fwd.7} parent=1 // pred_fallthru
      _
    // Predicated region
    $region26: #{fwd.7} parent=1 // pred_check
      _
    $region27: #{fwd.7} parent=1 // pred_check_branch
      %171 = sbr.rel (0) target = $region29
    $region28: #{fwd.7} parent=1 // pred_region
      %172 = dma.done [#allocation3], 32
    $region29: #{fwd.7} parent=1 // pred_fallthru
      _
    %173 = vsyncpa [#allocation3], 1

// kernel: fwd.6
$region0: #{fwd.6}
  #allocation0 [shape = 'u32[]', space=smem, size = 0x4, offset = 0x4, fixed_abs, tag = 'smem constant byte address 0x4 - core index']
  #allocation1 [shape = 'u32[144,128]{1,0:T(1,128)}', space=vmem, size = 0x12000, scoped, tag = 'internal scratch']
  #allocation2 [shape = 'bf16[16,32]{1,0:T(8,128)(2,1)}', space=vmem, size = 0x1000, scoped, tag = 'scratch operand']
  %s0 = inlined_call_operand.vmem [shape: f32[16,32], index: 0, kind: input, shape index: {}]
  %s1 = inlined_call_operand.vmem [shape: bf16[32,32], index: 1, kind: input, shape index: {}]
  %s2 = inlined_call_operand.vmem [shape: f32[1,32], index: 2, kind: input, shape index: {}]
  %s3 = inlined_call_operand.vmem [shape: f32[1,32], index: 3, kind: input, shape index: {}]
  %s4 = inlined_call_operand.vmem [shape: f32[1,32], index: 4, kind: input, shape index: {}]
  %s5 = inlined_call_operand.vmem [shape: bf16[32,64], index: 5, kind: input, shape index: {}]
  %s6 = inlined_call_operand.vmem [shape: f32[1,64], index: 6, kind: input, shape index: {}]
  %s7 = inlined_call_operand.hbm [shape: f32[16,64], index: 7, kind: output, shape index: {}]
  %s8 = sld [smem:[#allocation0]]
  $region42: #{fwd.6} parent=0
    _
  %s10 = ssub.s32 1, %s8
  %s11 = scalar_select 0, %s10, %s8
  $region1: #{fwd.6} parent=0
    #allocation3 [shape = 'u8[8192]{0}', space=vmem, size = 0x2000, scoped, tag = 'output window, operand 0, single buffered']
    #allocation4 [shape = 's32[1]{0}', space=sflag, size = 0x4, scoped, tag = 'scoped memory for fwd.6']
    %12 = vsyncpa [#allocation4], 0
    // Predicated region
    $region2: #{fwd.6} parent=1 // pred_check
      _
    $region3: #{fwd.6} parent=1 // pred_check_branch
      %14 = sbr.rel (0) target = $region5
    $region4: #{fwd.6} parent=1 // pred_region
      _
    $region5: #{fwd.6} parent=1 // pred_fallthru
      _
    // Predicated region
    $region6: #{fwd.6} parent=1 // pred_check
      _
    $region7: #{fwd.6} parent=1 // pred_check_branch
      %16 = sbr.rel (0) target = $region9
    $region8: #{fwd.6} parent=1 // pred_region
      _
    $region9: #{fwd.6} parent=1 // pred_fallthru
      _
    // Predicated region
    $region10: #{fwd.6} parent=1 // pred_check
      _
    $region11: #{fwd.6} parent=1 // pred_check_branch
      %18 = sbr.rel (0) target = $region13
    $region12: #{fwd.6} parent=1 // pred_region
      _
    $region13: #{fwd.6} parent=1 // pred_fallthru
      _
    // Predicated region
    $region14: #{fwd.6} parent=1 // pred_check
      _
    $region15: #{fwd.6} parent=1 // pred_check_branch
      %20 = sbr.rel (0) target = $region17
    $region16: #{fwd.6} parent=1 // pred_region
      _
    $region17: #{fwd.6} parent=1 // pred_fallthru
      _
    // Predicated region
    $region18: #{fwd.6} parent=1 // pred_check
      _
    $region19: #{fwd.6} parent=1 // pred_check_branch
      %22 = sbr.rel (0) target = $region21
    $region20: #{fwd.6} parent=1 // pred_region
      _
    $region21: #{fwd.6} parent=1 // pred_fallthru
      _
    // Predicated region
    $region22: #{fwd.6} parent=1 // pred_check
      _
    $region23: #{fwd.6} parent=1 // pred_check_branch
      %24 = sbr.rel (0) target = $region25
    $region24: #{fwd.6} parent=1 // pred_region
      _
    $region25: #{fwd.6} parent=1 // pred_fallthru
      _
    // Predicated region
    $region26: #{fwd.6} parent=1 // pred_check
      _
    $region27: #{fwd.6} parent=1 // pred_check_branch
      %26 = sbr.rel (0) target = $region29
    $region28: #{fwd.6} parent=1 // pred_region
      _
    $region29: #{fwd.6} parent=1 // pred_fallthru
      _
    %p28 = scmp.eq.s32.totalorder 0, 0
    // Predicated region
    $region30: #{fwd.6} parent=1 // pred_check
      %p29 = pneg %p28
    $region31: #{fwd.6} parent=1 // pred_check_branch
      %31 = sbr.rel (%p29) target = $region33
    $region32: #{fwd.6} parent=1 // pred_region
      %v32 = vld [vmem:[%s0] sm:$0xff]
      %v33 = vld [vmem:[%s0 + $0x8] sm:$0xff]
      %v34 = vpack.c.bf16 %v33, %v32
      %v35 = vld [vmem:[%s1] sm:$0xf]
      %v36 = vld [vmem:[%s1 + $0x4] sm:$0xf]
      %v37 = vld [vmem:[%s1 + $0x8] sm:$0xf]
      %v38 = vld [vmem:[%s1 + $0xc] sm:$0xf]
      %v39 = vld [vmem:[%s2] sm:$0x1]
      %v41 = vlaneseq
      %v42 = vshrl.u32 %v41, 7
      %v43 = vsub.s32 0, %v42
      %v44 = vrot.slane %v39, %v43
      %v50 = vunpack.c.l.b16 %v35
      %v51 = vunpack.c.l.b16 %v36
      %v52 = vunpack.c.l.b16 %v37
      %v53 = vunpack.c.l.b16 %v38
      %v54 = vpack.c.b16 %v51, %v50
      %v55 = vpack.c.b16 %v53, %v52
      %vm58 = vcmask 261120
      %v60 = vsel %vm58, %v34, 0
      %62 = vmatprep.subr.bf16.mxu0 0
      %63 = vmatpush1.bf16.msra.mxu0 0
      %64 = vmatprep.subr.bf16.mxu0 0
      %65 = vmatpush1.bf16.msra.mxu0 0
      %66 = vmatprep.subr.bf16.mxu0 0
      %67 = vmatpush1.bf16.msra.mxu0 0
      %68 = vmatprep.subr.bf16.mxu0 0
      %69 = vmatpush1.bf16.msra.mxu0 0
      %70 = vmatprep.subr.bf16.mxu0 0
      %71 = vmatpush1.bf16.msra.mxu0 0
      %72 = vmatprep.subr.bf16.mxu0 0
      %73 = vmatpush1.bf16.msra.mxu0 0
      %74 = vmatprep.subr.bf16.mxu0 0
      %75 = vmatpush1.bf16.msra.mxu0 %v55
      %76 = vmatprep.subr.bf16.mxu0 0
      %77 = vmatpush1.bf16.msra.mxu0 %v54
      %78 = vmatprep.subr.bf16.mxu0 0
      %79 = vmatpush2.bf16.msra.mxu0 0
      %80 = vmatprep.subr.bf16.mxu0 0
      %81 = vmatpush2.bf16.msra.mxu0 0
      %82 = vmatprep.subr.bf16.mxu0 0
      %83 = vmatpush2.bf16.msra.mxu0 0
      %84 = vmatprep.subr.bf16.mxu0 0
      %85 = vmatpush2.bf16.msra.mxu0 0
      %86 = vmatprep.subr.bf16.mxu0 0
      %87 = vmatpush2.bf16.msra.mxu0 0
      %88 = vmatprep.subr.bf16.mxu0 0
      %89 = vmatpush2.bf16.msra.mxu0 0
      %90 = vmatprep.subr.bf16.mxu0 0
      %91 = vmatpush2.bf16.msra.mxu0 0
      %92 = vmatprep.subr.bf16.mxu0 0
      %93 = vmatpush2.bf16.msra.mxu0 0
      %94 = vmatprep.mubr.bf16.mxu0 0
      %95 = vmatmul.mubr.bf16.gmra.mxu0 %v60
      %v96 = vpop.f32.mrf.mxu0
      %v97 = vadd.f32 %v44, %v96
      %v98 = vpop.f32.mrf.mxu0
      %v99 = vpop.f32.mrf.mxu0
      %v100 = vadd.f32 %v44, %v99
      %v101 = vpop.f32.mrf.mxu0
      %102 = vdwg.mxu0
      %v103 = vmul.f32 %v97, 0.5
      %v104 = vmul.f32 %v100, 0.5
      %v105 = vmul.f32 %v97, 0.70710677
      %v106 = vmul.f32 %v100, 0.70710677
      %v107 = verf.f32.pop %v105
      %v108 = verf.f32.pop %v106
      %v109 = vadd.f32 %v107, 1.0
      %v110 = vadd.f32 %v108, 1.0
      %v111 = vmul.f32 %v103, %v109
      %v112 = vmul.f32 %v104, %v110
      %v113 = vld [vmem:[%s3] sm:$0x1]
      %v114 = vld [vmem:[%s4] sm:$0x1]
      %v115 = vsel %vm58, %v111, 0.0
      %116 = vadd.xlane.f32.xlu0 %v115
      %v117 = vpop.xlane.xlu0 %116
      %v118 = vsel %vm58, %v112, 0.0
      %119 = vadd.xlane.f32.xlu0 %v118
      %v120 = vpop.xlane.xlu0 %119
      %v121 = vrcp.pop 32.0
      %v122 = vmul.f32 %v117, %v121
      %v123 = vmul.f32 %v120, %v121
      %v124 = vsub.f32 %v111, %v122
      %v125 = vsub.f32 %v112, %v123
      %v126 = vmul.f32 %v124, %v124
      %v127 = vmul.f32 %v125, %v125
      %v128 = vsel %vm58, %v126, 0.0
      %129 = vadd.xlane.f32.xlu0 %v128
      %v130 = vpop.xlane.xlu0 %129
      %v131 = vsel %vm58, %v127, 0.0
      %132 = vadd.xlane.f32.xlu0 %v131
      %v133 = vpop.xlane.xlu0 %132
      %v134 = vmul.f32 %v130, %v121
      %v135 = vmul.f32 %v133, %v121
      %v136 = vadd.f32 %v134, 1e-05
      %v137 = vadd.f32 %v135, 1e-05
      %v138 = vrsqrt.pop %v136
      %v139 = vrsqrt.pop %v137
      %v140 = vmul.f32 %v124, %v138
      %v141 = vmul.f32 %v125, %v139
      %v143 = vlaneseq
      %v144 = vshrl.u32 %v143, 7
      %v145 = vsub.s32 0, %v144
      %v146 = vrot.slane %v113, %v145
      %v148 = vmul.f32 %v140, %v146
      %v149 = vmul.f32 %v141, %v146
      %v151 = vlaneseq
      %v152 = vshrl.u32 %v151, 7
      %v153 = vsub.s32 0, %v152
      %v154 = vrot.slane %v114, %v153
      %v156 = vadd.f32 %v148, %v154
      %v157 = vadd.f32 %v149, %v154
      %v158 = vpack.c.bf16 %v157, %v156
      %v160 = vunpack.c.l.b16 %v158
      %v161 = vunpack.c.h.b16 %v158
      %v162 = vpack.c.b16 %v160, %v160
      %v163 = vpack.c.b16 %v161, %v161
      %vm166 = vcmask 257024
      %167 = vst.msk [vmem:[#allocation2] sm:$0xf] %vm166, %v162
      %168 = vst.msk [vmem:[#allocation2 + $0x4] sm:$0xf] %vm166, %v163
    $region33: #{fwd.6} parent=1 // pred_fallthru
      _
    %v169 = vld [vmem:[#allocation2] sm:$0xf]
    %v170 = vld [vmem:[#allocation2 + $0x4] sm:$0xf]
    %v171 = vld [vmem:[%s5] sm:$0xf]
    %v172 = vld [vmem:[%s5 + $0x4] sm:$0xf]
    %v173 = vld [vmem:[%s5 + $0x8] sm:$0xf]
    %v174 = vld [vmem:[%s5 + $0xc] sm:$0xf]
    %v175 = vld [vmem:[%s6] sm:$0x1]
    %v177 = vlaneseq
    %v178 = vshrl.u32 %v177, 7
    %v179 = vsub.s32 0, %v178
    %v180 = vrot.slane %v175, %v179
    %v184 = vunpack.c.l.b16 %v169
    %v185 = vunpack.c.l.b16 %v170
    %v186 = vpack.c.b16 %v185, %v184
    %v191 = vunpack.c.l.b16 %v171
    %v192 = vunpack.c.l.b16 %v172
    %v193 = vunpack.c.l.b16 %v173
    %v194 = vunpack.c.l.b16 %v174
    %v195 = vpack.c.b16 %v192, %v191
    %v196 = vpack.c.b16 %v194, %v193
    %vm199 = vcmask 261120
    %v201 = vsel %vm199, %v186, 0
    %203 = vmatprep.subr.bf16.mxu0 0
    %204 = vmatpush1.bf16.msra.mxu0 0
    %205 = vmatprep.subr.bf16.mxu0 0
    %206 = vmatpush1.bf16.msra.mxu0 0
    %207 = vmatprep.subr.bf16.mxu0 0
    %208 = vmatpush1.bf16.msra.mxu0 0
    %209 = vmatprep.subr.bf16.mxu0 0
    %210 = vmatpush1.bf16.msra.mxu0 0
    %211 = vmatprep.subr.bf16.mxu0 0
    %212 = vmatpush1.bf16.msra.mxu0 0
    %213 = vmatprep.subr.bf16.mxu0 0
    %214 = vmatpush1.bf16.msra.mxu0 0
    %215 = vmatprep.subr.bf16.mxu0 0
    %216 = vmatpush1.bf16.msra.mxu0 %v196
    %217 = vmatprep.subr.bf16.mxu0 0
    %218 = vmatpush1.bf16.msra.mxu0 %v195
    %219 = vmatprep.subr.bf16.mxu0 0
    %220 = vmatpush2.bf16.msra.mxu0 0
    %221 = vmatprep.subr.bf16.mxu0 0
    %222 = vmatpush2.bf16.msra.mxu0 0
    %223 = vmatprep.subr.bf16.mxu0 0
    %224 = vmatpush2.bf16.msra.mxu0 0
    %225 = vmatprep.subr.bf16.mxu0 0
    %226 = vmatpush2.bf16.msra.mxu0 0
    %227 = vmatprep.subr.bf16.mxu0 0
    %228 = vmatpush2.bf16.msra.mxu0 0
    %229 = vmatprep.subr.bf16.mxu0 0
    %230 = vmatpush2.bf16.msra.mxu0 0
    %231 = vmatprep.subr.bf16.mxu0 0
    %232 = vmatpush2.bf16.msra.mxu0 0
    %233 = vmatprep.subr.bf16.mxu0 0
    %234 = vmatpush2.bf16.msra.mxu0 0
    %235 = vmatprep.mubr.bf16.mxu0 0
    %236 = vmatmul.mubr.bf16.gmra.mxu0 %v201
    %v237 = vpop.f32.mrf.mxu0
    %v238 = vadd.f32 %v180, %v237
    %v239 = vpop.f32.mrf.mxu0
    %v240 = vpop.f32.mrf.mxu0
    %v241 = vadd.f32 %v180, %v240
    %v242 = vpop.f32.mrf.mxu0
    %243 = vdwg.mxu0
    %vm244 = vcmask 523264
    %245 = vst.msk [vmem:[#allocation3] sm:$0xff] %vm244, %v238
    %246 = vst.msk [vmem:[#allocation3 + $0x8] sm:$0xff] %vm244, %v241
    // Predicated region
    $region34: #{fwd.6} parent=1 // pred_check
      _
    $region35: #{fwd.6} parent=1 // pred_check_branch
      %248 = sbr.rel (0) target = $region37
    $region36: #{fwd.6} parent=1 // pred_region
      %s250 = ssub.s32 256, 256
      %251 = vsyncadd [#allocation4], %s250
      %s252 = sshll.u32 [#allocation3], 4
      %s253 = int_to_ptr.vmem [resolvable:$true] %s252
      %258 = dma.vmem_to_hbm [thread:$0]  %s253, 256, %s7, [#allocation4], 128, 128, 8
    $region37: #{fwd.6} parent=1 // pred_fallthru
      _
    // Predicated region
    $region38: #{fwd.6} parent=1 // pred_check
      _
    $region39: #{fwd.6} parent=1 // pred_check_branch
      %260 = sbr.rel (0) target = $region41
    $region40: #{fwd.6} parent=1 // pred_region
      %261 = dma.done [#allocation4], 256
    $region41: #{fwd.6} parent=1 // pred_fallthru
      _
    %262 = vsyncpa [#allocation4], 1

// kernel: fwd.5
$region0: #{fwd.5}
  #allocation0 [shape = 'u32[]', space=smem, size = 0x4, offset = 0x4, fixed_abs, tag = 'smem constant byte address 0x4 - core index']
  #allocation1 [shape = 'u32[144,128]{1,0:T(1,128)}', space=vmem, size = 0x12000, scoped, tag = 'internal scratch']
  %s0 = inlined_call_operand.vmem [shape: f32[2,8,32], index: 0, kind: input, shape index: {}]
  %s1 = inlined_call_operand.vmem [shape: bf16[8,16], index: 1, kind: input, shape index: {}]
  %s2 = inlined_call_operand.vmem [shape: bf16[32,64], index: 2, kind: input, shape index: {}]
  %s3 = inlined_call_operand.vmem [shape: f32[2,1,32], index: 3, kind: input, shape index: {}]
  %s4 = inlined_call_operand.vmem [shape: f32[2,1,32], index: 4, kind: input, shape index: {}]
  %s5 = inlined_call_operand.vmem [shape: bf16[2,32,64], index: 5, kind: input, shape index: {}]
  %s6 = inlined_call_operand.vmem [shape: f32[2,1,64], index: 6, kind: input, shape index: {}]
  %s7 = inlined_call_operand.vmem [shape: bf16[2,64,32], index: 7, kind: input, shape index: {}]
  %s8 = inlined_call_operand.vmem [shape: f32[2,1,32], index: 8, kind: input, shape index: {}]
  %s9 = inlined_call_operand.vmem [shape: f32[2,1,32], index: 9, kind: input, shape index: {}]
  %s10 = inlined_call_operand.vmem [shape: f32[2,1,32], index: 10, kind: input, shape index: {}]
  %s11 = inlined_call_operand.vmem [shape: f32[2,8,32], index: 11, kind: output, shape index: {}]
  %s12 = sld [smem:[#allocation0]]
  $region81: #{fwd.5} parent=0
    _
  %s14 = ssub.s32 1, %s12
  %s15 = scalar_select 0, %s14, %s12
  loop: start=0, step=1, limit=6
  $region2: #{fwd.5} parent=0 // loop_pre_header
    _
  $region3: #{fwd.5} parent=0 // loop_header
    %s17 = sphi 0, %s21
    %p18 = scmp.ge.s32.totalorder %s17, 6
    %s24 = sphi 0, %s36
    %s25 = sphi 0, %s32
    %s26 = sphi 0, %s24
    %s27 = sphi 0, %s25
    %s28 = sphi 0, %s26
    %s29 = sphi 0, %s27
    %s39 = sphi 0, %s41
    %s42 = sphi 0, %s39
    %s43 = sphi 0, %s42
    %s59 = sphi 0, %s43
    %s63 = sphi 0, %s63
    %s65 = sphi 0, %s63
    %s66 = sphi 0, %s65
    %s80 = sphi 0, %s66
    %s84 = sphi 0, %s84
    %s86 = sphi 0, %s84
    %s87 = sphi 0, %s86
    %s101 = sphi 0, %s87
    %s107 = sphi 0, %s109
    %s110 = sphi 0, %s107
    %s111 = sphi 0, %s110
    %s127 = sphi 0, %s111
    %s133 = sphi 0, %s135
    %s136 = sphi 0, %s133
    %s137 = sphi 0, %s136
    %s153 = sphi 0, %s137
    %s159 = sphi 0, %s161
    %s162 = sphi 0, %s159
    %s163 = sphi 0, %s162
    %s179 = sphi 0, %s163
    %s185 = sphi 0, %s187
    %s188 = sphi 0, %s185
    %s189 = sphi 0, %s188
    %s205 = sphi 0, %s189
    %s211 = sphi 0, %s213
    %s214 = sphi 0, %s211
    %s215 = sphi 0, %s214
    %s231 = sphi 0, %s215
    %s237 = sphi 0, %s239
    %s240 = sphi 0, %s237
    %s241 = sphi 0, %s240
    %s257 = sphi 0, %s241
    %s263 = sphi 0, %s265
    %s266 = sphi 0, %s263
    %s267 = sphi 0, %s266
    %s283 = sphi 0, %s267
    %s289 = sphi 0, %s291
    %s292 = sphi 0, %s289
    %s293 = sphi 0, %s292
    %s309 = sphi 0, %s293
    %s315 = sphi 0, %s317
    %s318 = sphi 0, %s315
    %s319 = sphi 0, %s318
    %s335 = sphi 0, %s319
  $region4: #{fwd.5} parent=0 // loop_header_branch
    %20 = sbr.rel (%p18) target = $region8
  $region5: #{fwd.5} parent=0 // loop_body
    %s22 = ssub.s32 %s17, 1
    %s23 = ssub.s32 %s17, 2
    %s30 = sadd.s32 1, %s25
    %p31 = scmp.ge.s32.totalorder %s30, 2
    %s32 = scalar_select %p31, 0, %s30
    %s33 = sadd.s32 1, %s24
    %s34 = scalar_select %p31, %s33, %s24
    %p35 = scmp.ge.s32.totalorder %s34, 2
    %s36 = scalar_select %p35, 0, %s34
    %s37 = ssub.s32 %s24, %s36
    %p38 = scmp.eq.s32.totalorder %s37, 0
    %s40 = sadd.s32 %s39, 1
    %s41 = scalar_select %p38, %s39, %s40
    %p44 = pneg %p38
    %p45 = scmp.eq.s32.totalorder %s17, 3
    %p46 = por %p44, %p45
    %p47 = scmp.ne.s32.totalorder %s39, %s42
    %p48 = scmp.eq.s32.totalorder %s17, 0
    %p49 = por %p47, %p48
    %p50 = scmp.ne.s32.totalorder %s39, %s42
    %p51 = scmp.eq.s32.totalorder %s22, 3
    %p52 = por %p50, %p51
    %p53 = scmp.ne.s32.totalorder %s42, %s43
    %p54 = scmp.eq.s32.totalorder %s22, 0
    %p55 = por %p53, %p54
    %p56 = scmp.ne.s32.totalorder %s42, %s43
    %p57 = scmp.eq.s32.totalorder %s23, 3
    %p58 = por %p56, %p57
    %p60 = scmp.ne.s32.totalorder %s43, %s59
    %p61 = scmp.eq.s32.totalorder %s23, 0
    %p62 = por %p60, %p61
    %s64 = sadd.s32 %s63, 1
    %p67 = scmp.eq.s32.totalorder %s17, 3
    %p68 = scmp.ne.s32.totalorder %s63, %s65
    %p69 = scmp.eq.s32.totalorder %s17, 0
    %p70 = por %p68, %p69
    %p71 = scmp.ne.s32.totalorder %s63, %s65
    %p72 = scmp.eq.s32.totalorder %s22, 3
    %p73 = por %p71, %p72
    %p74 = scmp.ne.s32.totalorder %s65, %s66
    %p75 = scmp.eq.s32.totalorder %s22, 0
    %p76 = por %p74, %p75
    %p77 = scmp.ne.s32.totalorder %s65, %s66
    %p78 = scmp.eq.s32.totalorder %s23, 3
    %p79 = por %p77, %p78
    %p81 = scmp.ne.s32.totalorder %s66, %s80
    %p82 = scmp.eq.s32.totalorder %s23, 0
    %p83 = por %p81, %p82
    %s85 = sadd.s32 %s84, 1
    %p88 = scmp.eq.s32.totalorder %s17, 3
    %p89 = scmp.ne.s32.totalorder %s84, %s86
    %p90 = scmp.eq.s32.totalorder %s17, 0
    %p91 = por %p89, %p90
    %p92 = scmp.ne.s32.totalorder %s84, %s86
    %p93 = scmp.eq.s32.totalorder %s22, 3
    %p94 = por %p92, %p93
    %p95 = scmp.ne.s32.totalorder %s86, %s87
    %p96 = scmp.eq.s32.totalorder %s22, 0
    %p97 = por %p95, %p96
    %p98 = scmp.ne.s32.totalorder %s86, %s87
    %p99 = scmp.eq.s32.totalorder %s23, 3
    %p100 = por %p98, %p99
    %p102 = scmp.ne.s32.totalorder %s87, %s101
    %p103 = scmp.eq.s32.totalorder %s23, 0
    %p104 = por %p102, %p103
    %s105 = ssub.s32 %s25, %s32
    %p106 = scmp.eq.s32.totalorder %s105, 0
    %s108 = sadd.s32 %s107, 1
    %s109 = scalar_select %p106, %s107, %s108
    %p112 = pneg %p106
    %p113 = scmp.eq.s32.totalorder %s17, 3
    %p114 = por %p112, %p113
    %p115 = scmp.ne.s32.totalorder %s107, %s110
    %p116 = scmp.eq.s32.totalorder %s17, 0
    %p117 = por %p115, %p116
    %p118 = scmp.ne.s32.totalorder %s107, %s110
    %p119 = scmp.eq.s32.totalorder %s22, 3
    %p120 = por %p118, %p119
    %p121 = scmp.ne.s32.totalorder %s110, %s111
    %p122 = scmp.eq.s32.totalorder %s22, 0
    %p123 = por %p121, %p122
    %p124 = scmp.ne.s32.totalorder %s110, %s111
    %p125 = scmp.eq.s32.totalorder %s23, 3
    %p126 = por %p124, %p125
    %p128 = scmp.ne.s32.totalorder %s111, %s127
    %p129 = scmp.eq.s32.totalorder %s23, 0
    %p130 = por %p128, %p129
    %s131 = ssub.s32 %s25, %s32
    %p132 = scmp.eq.s32.totalorder %s131, 0
    %s134 = sadd.s32 %s133, 1
    %s135 = scalar_select %p132, %s133, %s134
    %p138 = pneg %p132
    %p139 = scmp.eq.s32.totalorder %s17, 3
    %p140 = por %p138, %p139
    %p141 = scmp.ne.s32.totalorder %s133, %s136
    %p142 = scmp.eq.s32.totalorder %s17, 0
    %p143 = por %p141, %p142
    %p144 = scmp.ne.s32.totalorder %s133, %s136
    %p145 = scmp.eq.s32.totalorder %s22, 3
    %p146 = por %p144, %p145
    %p147 = scmp.ne.s32.totalorder %s136, %s137
    %p148 = scmp.eq.s32.totalorder %s22, 0
    %p149 = por %p147, %p148
    %p150 = scmp.ne.s32.totalorder %s136, %s137
    %p151 = scmp.eq.s32.totalorder %s23, 3
    %p152 = por %p150, %p151
    %p154 = scmp.ne.s32.totalorder %s137, %s153
    %p155 = scmp.eq.s32.totalorder %s23, 0
    %p156 = por %p154, %p155
    %s157 = ssub.s32 %s25, %s32
    %p158 = scmp.eq.s32.totalorder %s157, 0
    %s160 = sadd.s32 %s159, 1
    %s161 = scalar_select %p158, %s159, %s160
    %p164 = pneg %p158
    %p165 = scmp.eq.s32.totalorder %s17, 3
    %p166 = por %p164, %p165
    %p167 = scmp.ne.s32.totalorder %s159, %s162
    %p168 = scmp.eq.s32.totalorder %s17, 0
    %p169 = por %p167, %p168
    %p170 = scmp.ne.s32.totalorder %s159, %s162
    %p171 = scmp.eq.s32.totalorder %s22, 3
    %p172 = por %p170, %p171
    %p173 = scmp.ne.s32.totalorder %s162, %s163
    %p174 = scmp.eq.s32.totalorder %s22, 0
    %p175 = por %p173, %p174
    %p176 = scmp.ne.s32.totalorder %s162, %s163
    %p177 = scmp.eq.s32.totalorder %s23, 3
    %p178 = por %p176, %p177
    %p180 = scmp.ne.s32.totalorder %s163, %s179
    %p181 = scmp.eq.s32.totalorder %s23, 0
    %p182 = por %p180, %p181
    %s183 = ssub.s32 %s25, %s32
    %p184 = scmp.eq.s32.totalorder %s183, 0
    %s186 = sadd.s32 %s185, 1
    %s187 = scalar_select %p184, %s185, %s186
    %p190 = pneg %p184
    %p191 = scmp.eq.s32.totalorder %s17, 3
    %p192 = por %p190, %p191
    %p193 = scmp.ne.s32.totalorder %s185, %s188
    %p194 = scmp.eq.s32.totalorder %s17, 0
    %p195 = por %p193, %p194
    %p196 = scmp.ne.s32.totalorder %s185, %s188
    %p197 = scmp.eq.s32.totalorder %s22, 3
    %p198 = por %p196, %p197
    %p199 = scmp.ne.s32.totalorder %s188, %s189
    %p200 = scmp.eq.s32.totalorder %s22, 0
    %p201 = por %p199, %p200
    %p202 = scmp.ne.s32.totalorder %s188, %s189
    %p203 = scmp.eq.s32.totalorder %s23, 3
    %p204 = por %p202, %p203
    %p206 = scmp.ne.s32.totalorder %s189, %s205
    %p207 = scmp.eq.s32.totalorder %s23, 0
    %p208 = por %p206, %p207
    %s209 = ssub.s32 %s25, %s32
    %p210 = scmp.eq.s32.totalorder %s209, 0
    %s212 = sadd.s32 %s211, 1
    %s213 = scalar_select %p210, %s211, %s212
    %p216 = pneg %p210
    %p217 = scmp.eq.s32.totalorder %s17, 3
    %p218 = por %p216, %p217
    %p219 = scmp.ne.s32.totalorder %s211, %s214
    %p220 = scmp.eq.s32.totalorder %s17, 0
    %p221 = por %p219, %p220
    %p222 = scmp.ne.s32.totalorder %s211, %s214
    %p223 = scmp.eq.s32.totalorder %s22, 3
    %p224 = por %p222, %p223
    %p225 = scmp.ne.s32.totalorder %s214, %s215
    %p226 = scmp.eq.s32.totalorder %s22, 0
    %p227 = por %p225, %p226
    %p228 = scmp.ne.s32.totalorder %s214, %s215
    %p229 = scmp.eq.s32.totalorder %s23, 3
    %p230 = por %p228, %p229
    %p232 = scmp.ne.s32.totalorder %s215, %s231
    %p233 = scmp.eq.s32.totalorder %s23, 0
    %p234 = por %p232, %p233
    %s235 = ssub.s32 %s25, %s32
    %p236 = scmp.eq.s32.totalorder %s235, 0
    %s238 = sadd.s32 %s237, 1
    %s239 = scalar_select %p236, %s237, %s238
    %p242 = pneg %p236
    %p243 = scmp.eq.s32.totalorder %s17, 3
    %p244 = por %p242, %p243
    %p245 = scmp.ne.s32.totalorder %s237, %s240
    %p246 = scmp.eq.s32.totalorder %s17, 0
    %p247 = por %p245, %p246
    %p248 = scmp.ne.s32.totalorder %s237, %s240
    %p249 = scmp.eq.s32.totalorder %s22, 3
    %p250 = por %p248, %p249
    %p251 = scmp.ne.s32.totalorder %s240, %s241
    %p252 = scmp.eq.s32.totalorder %s22, 0
    %p253 = por %p251, %p252
    %p254 = scmp.ne.s32.totalorder %s240, %s241
    %p255 = scmp.eq.s32.totalorder %s23, 3
    %p256 = por %p254, %p255
    %p258 = scmp.ne.s32.totalorder %s241, %s257
    %p259 = scmp.eq.s32.totalorder %s23, 0
    %p260 = por %p258, %p259
    %s261 = ssub.s32 %s25, %s32
    %p262 = scmp.eq.s32.totalorder %s261, 0
    %s264 = sadd.s32 %s263, 1
    %s265 = scalar_select %p262, %s263, %s264
    %p268 = pneg %p262
    %p269 = scmp.eq.s32.totalorder %s17, 3
    %p270 = por %p268, %p269
    %p271 = scmp.ne.s32.totalorder %s263, %s266
    %p272 = scmp.eq.s32.totalorder %s17, 0
    %p273 = por %p271, %p272
    %p274 = scmp.ne.s32.totalorder %s263, %s266
    %p275 = scmp.eq.s32.totalorder %s22, 3
    %p276 = por %p274, %p275
    %p277 = scmp.ne.s32.totalorder %s266, %s267
    %p278 = scmp.eq.s32.totalorder %s22, 0
    %p279 = por %p277, %p278
    %p280 = scmp.ne.s32.totalorder %s266, %s267
    %p281 = scmp.eq.s32.totalorder %s23, 3
    %p282 = por %p280, %p281
    %p284 = scmp.ne.s32.totalorder %s267, %s283
    %p285 = scmp.eq.s32.totalorder %s23, 0
    %p286 = por %p284, %p285
    %s287 = ssub.s32 %s25, %s32
    %p288 = scmp.eq.s32.totalorder %s287, 0
    %s290 = sadd.s32 %s289, 1
    %s291 = scalar_select %p288, %s289, %s290
    %p294 = pneg %p288
    %p295 = scmp.eq.s32.totalorder %s17, 3
    %p296 = por %p294, %p295
    %p297 = scmp.ne.s32.totalorder %s289, %s292
    %p298 = scmp.eq.s32.totalorder %s17, 0
    %p299 = por %p297, %p298
    %p300 = scmp.ne.s32.totalorder %s289, %s292
    %p301 = scmp.eq.s32.totalorder %s22, 3
    %p302 = por %p300, %p301
    %p303 = scmp.ne.s32.totalorder %s292, %s293
    %p304 = scmp.eq.s32.totalorder %s22, 0
    %p305 = por %p303, %p304
    %p306 = scmp.ne.s32.totalorder %s292, %s293
    %p307 = scmp.eq.s32.totalorder %s23, 3
    %p308 = por %p306, %p307
    %p310 = scmp.ne.s32.totalorder %s293, %s309
    %p311 = scmp.eq.s32.totalorder %s23, 0
    %p312 = por %p310, %p311
    %s313 = ssub.s32 %s24, %s36
    %p314 = scmp.eq.s32.totalorder %s313, 0
    %s316 = sadd.s32 %s315, 1
    %s317 = scalar_select %p314, %s315, %s316
    %p320 = pneg %p314
    %p321 = scmp.eq.s32.totalorder %s17, 3
    %p322 = por %p320, %p321
    %p323 = scmp.ne.s32.totalorder %s315, %s318
    %p324 = scmp.eq.s32.totalorder %s17, 0
    %p325 = por %p323, %p324
    %p326 = scmp.ne.s32.totalorder %s315, %s318
    %p327 = scmp.eq.s32.totalorder %s22, 3
    %p328 = por %p326, %p327
    %p329 = scmp.ne.s32.totalorder %s318, %s319
    %p330 = scmp.eq.s32.totalorder %s22, 0
    %p331 = por %p329, %p330
    %p332 = scmp.ne.s32.totalorder %s318, %s319
    %p333 = scmp.eq.s32.totalorder %s23, 3
    %p334 = por %p332, %p333
    %p336 = scmp.ne.s32.totalorder %s319, %s335
    %p337 = scmp.eq.s32.totalorder %s23, 0
    %p338 = por %p336, %p337
    %p339 = scmp.le.s32.totalorder 1, %s17
    %p340 = scmp.lt.s32.totalorder %s17, 5
    %p341 = pnand %p339, %p340
    %p342 = pneg %p341
    // Predicated region
    $region9: #{fwd.5} parent=5 // pred_check
      _
    $region10: #{fwd.5} parent=5 // pred_check_branch
      %344 = sbr.rel (%p341) target = $region12
    $region11: #{fwd.5} parent=5 // pred_region
      %s345 = ssub.s32 %s17, 1
      // Predicated region
      $region13: #{fwd.5} parent=11 // pred_check
        %p346 = pneg %p76
      $region14: #{fwd.5} parent=11 // pred_check_branch
        %348 = sbr.rel (%p346) target = $region16
      $region15: #{fwd.5} parent=11 // pred_region
        _
      $region16: #{fwd.5} parent=11 // pred_fallthru
        _
      // Predicated region
      $region17: #{fwd.5} parent=11 // pred_check
        %p349 = pneg %p97
      $region18: #{fwd.5} parent=11 // pred_check_branch
        %351 = sbr.rel (%p349) target = $region20
      $region19: #{fwd.5} parent=11 // pred_region
        _
      $region20: #{fwd.5} parent=11 // pred_fallthru
        _
    $region12: #{fwd.5} parent=5 // pred_fallthru
      _
    %p352 = scmp.lt.s32.totalorder %s17, 4
    // Predicated region
    $region21: #{fwd.5} parent=5 // pred_check
      %p353 = pneg %p352
    $region22: #{fwd.5} parent=5 // pred_check_branch
      %355 = sbr.rel (%p353) target = $region24
    $region23: #{fwd.5} parent=5 // pred_region
      // Predicated region
      $region25: #{fwd.5} parent=23 // pred_check
        %p356 = pneg %p49
      $region26: #{fwd.5} parent=23 // pred_check_branch
        %358 = sbr.rel (%p356) target = $region28
      $region27: #{fwd.5} parent=23 // pred_region
        %p359 = scmp.lt.s32.totalorder %s24, 1
        %s360 = scalar_select %p359, %s24, 1
        %s361 = smul.addr %s360, 8
        %s362 = scalar_lea.vmem %s0, %s361
      $region28: #{fwd.5} parent=23 // pred_fallthru
        _
      // Predicated region
      $region29: #{fwd.5} parent=23 // pred_check
        %p363 = pneg %p117
      $region30: #{fwd.5} parent=23 // pred_check_branch
        %365 = sbr.rel (%p363) target = $region32
      $region31: #{fwd.5} parent=23 // pred_region
        %p366 = scmp.lt.s32.totalorder %s25, 1
        %s367 = scalar_select %p366, %s25, 1
        %s368 = scalar_lea.vmem %s3, %s367
      $region32: #{fwd.5} parent=23 // pred_fallthru
        _
      // Predicated region
      $region33: #{fwd.5} parent=23 // pred_check
        %p369 = pneg %p143
      $region34: #{fwd.5} parent=23 // pred_check_branch
        %371 = sbr.rel (%p369) target = $region36
      $region35: #{fwd.5} parent=23 // pred_region
        %p372 = scmp.lt.s32.totalorder %s25, 1
        %s373 = scalar_select %p372, %s25, 1
        %s374 = scalar_lea.vmem %s4, %s373
      $region36: #{fwd.5} parent=23 // pred_fallthru
        _
      // Predicated region
      $region37: #{fwd.5} parent=23 // pred_check
        %p375 = pneg %p169
      $region38: #{fwd.5} parent=23 // pred_check_branch
        %377 = sbr.rel (%p375) target = $region40
      $region39: #{fwd.5} parent=23 // pred_region
        %p378 = scmp.lt.s32.totalorder %s25, 1
        %s379 = scalar_select %p378, %s25, 1
        %s380 = smul.addr %s379, 4
        %s381 = smul.addr %s380, 4
        %s382 = scalar_lea.vmem %s5, %s381
      $region40: #{fwd.5} parent=23 // pred_fallthru
        _
      // Predicated region
      $region41: #{fwd.5} parent=23 // pred_check
        %p383 = pneg %p195
      $region42: #{fwd.5} parent=23 // pred_check_branch
        %385 = sbr.rel (%p383) target = $region44
      $region43: #{fwd.5} parent=23 // pred_region
        %p386 = scmp.lt.s32.totalorder %s25, 1
        %s387 = scalar_select %p386, %s25, 1
        %s388 = scalar_lea.vmem %s6, %s387
      $region44: #{fwd.5} parent=23 // pred_fallthru
        _
      // Predicated region
      $region45: #{fwd.5} parent=23 // pred_check
        %p389 = pneg %p221
      $region46: #{fwd.5} parent=23 // pred_check_branch
        %391 = sbr.rel (%p389) target = $region48
      $region47: #{fwd.5} parent=23 // pred_region
        %p392 = scmp.lt.s32.totalorder %s25, 1
        %s393 = scalar_select %p392, %s25, 1
        %s394 = smul.addr %s393, 8
        %s395 = smul.addr %s394, 4
        %s396 = scalar_lea.vmem %s7, %s395
      $region48: #{fwd.5} parent=23 // pred_fallthru
        _
      // Predicated region
      $region49: #{fwd.5} parent=23 // pred_check
        %p397 = pneg %p247
      $region50: #{fwd.5} parent=23 // pred_check_branch
        %399 = sbr.rel (%p397) target = $region52
      $region51: #{fwd.5} parent=23 // pred_region
        %p400 = scmp.lt.s32.totalorder %s25, 1
        %s401 = scalar_select %p400, %s25, 1
        %s402 = scalar_lea.vmem %s8, %s401
      $region52: #{fwd.5} parent=23 // pred_fallthru
        _
      // Predicated region
      $region53: #{fwd.5} parent=23 // pred_check
        %p403 = pneg %p273
      $region54: #{fwd.5} parent=23 // pred_check_branch
        %405 = sbr.rel (%p403) target = $region56
      $region55: #{fwd.5} parent=23 // pred_region
        %p406 = scmp.lt.s32.totalorder %s25, 1
        %s407 = scalar_select %p406, %s25, 1
        %s408 = scalar_lea.vmem %s9, %s407
      $region56: #{fwd.5} parent=23 // pred_fallthru
        _
      // Predicated region
      $region57: #{fwd.5} parent=23 // pred_check
        %p409 = pneg %p299
      $region58: #{fwd.5} parent=23 // pred_check_branch
        %411 = sbr.rel (%p409) target = $region60
      $region59: #{fwd.5} parent=23 // pred_region
        %p412 = scmp.lt.s32.totalorder %s25, 1
        %s413 = scalar_select %p412, %s25, 1
        %s414 = scalar_lea.vmem %s10, %s413
      $region60: #{fwd.5} parent=23 // pred_fallthru
        _
    $region24: #{fwd.5} parent=5 // pred_fallthru
      _
    %p415 = scmp.le.s32.totalorder 1, %s17
    %p416 = scmp.lt.s32.totalorder %s17, 5
    %p417 = pnand %p415, %p416
    %p418 = pneg %p417
    // Predicated region
    $region61: #{fwd.5} parent=5 // pred_check
      _
    $region62: #{fwd.5} parent=5 // pred_check_branch
      %420 = sbr.rel (%p417) target = $region64
    $region63: #{fwd.5} parent=5 // pred_region
      %s421 = ssub.s32 %s17, 1
      %p422 = scmp.lt.s32.totalorder %s26, 1
      %s423 = scalar_select %p422, %s26, 1
      %s424 = smul.addr %s423, 8
      %s425 = scalar_lea.vmem %s0, %s424
      %p426 = pneg %p55
      %p427 = pneg %p52
      %p428 = pneg %p76
      %p429 = pneg %p73
      %p430 = pneg %p97
      %p431 = pneg %p94
      %p432 = scmp.lt.s32.totalorder %s27, 1
      %s433 = scalar_select %p432, %s27, 1
      %s434 = scalar_lea.vmem %s3, %s433
      %p435 = pneg %p123
      %p436 = pneg %p120
      %p437 = scmp.lt.s32.totalorder %s27, 1
      %s438 = scalar_select %p437, %s27, 1
      %s439 = scalar_lea.vmem %s4, %s438
      %p440 = pneg %p149
      %p441 = pneg %p146
      %p442 = scmp.lt.s32.totalorder %s27, 1
      %s443 = scalar_select %p442, %s27, 1
      %s444 = smul.addr %s443, 4
      %s445 = smul.addr %s444, 4
      %s446 = scalar_lea.vmem %s5, %s445
      %p447 = pneg %p175
      %p448 = pneg %p172
      %p449 = scmp.lt.s32.totalorder %s27, 1
      %s450 = scalar_select %p449, %s27, 1
      %s451 = scalar_lea.vmem %s6, %s450
      %p452 = pneg %p201
      %p453 = pneg %p198
      %p454 = scmp.lt.s32.totalorder %s27, 1
      %s455 = scalar_select %p454, %s27, 1
      %s456 = smul.addr %s455, 8
      %s457 = smul.addr %s456, 4
      %s458 = scalar_lea.vmem %s7, %s457
      %p459 = pneg %p227
      %p460 = pneg %p224
      %p461 = scmp.lt.s32.totalorder %s27, 1
      %s462 = scalar_select %p461, %s27, 1
      %s463 = scalar_lea.vmem %s8, %s462
      %p464 = pneg %p253
      %p465 = pneg %p250
      %p466 = scmp.lt.s32.totalorder %s27, 1
      %s467 = scalar_select %p466, %s27, 1
      %s468 = scalar_lea.vmem %s9, %s467
      %p469 = pneg %p279
      %p470 = pneg %p276
      %p471 = scmp.lt.s32.totalorder %s27, 1
      %s472 = scalar_select %p471, %s27, 1
      %s473 = scalar_lea.vmem %s10, %s472
      %p474 = pneg %p305
      %p475 = pneg %p302
      %p476 = pneg %p331
      %p477 = pneg %p328
      %p478 = scmp.lt.s32.totalorder %s26, 1
      %s479 = scalar_select %p478, %s26, 1
      %s480 = smul.addr %s479, 8
      %s481 = scalar_lea.vmem %s11, %s480
      %p482 = scmp.lt.s32.totalorder %s26, 1
      %s483 = scalar_select %p482, %s26, 1
      %s484 = smul.addr %s483, 8
      %s485 = scalar_lea.vmem %s0, %s484
      %p486 = scmp.lt.s32.totalorder %s27, 1
      %s487 = scalar_select %p486, %s27, 1
      %s488 = scalar_lea.vmem %s3, %s487
      %p489 = scmp.lt.s32.totalorder %s27, 1
      %s490 = scalar_select %p489, %s27, 1
      %s491 = scalar_lea.vmem %s4, %s490
      %p492 = scmp.lt.s32.totalorder %s27, 1
      %s493 = scalar_select %p492, %s27, 1
      %s494 = smul.addr %s493, 4
      %s495 = smul.addr %s494, 4
      %s496 = scalar_lea.vmem %s5, %s495
      %p497 = scmp.lt.s32.totalorder %s27, 1
      %s498 = scalar_select %p497, %s27, 1
      %s499 = scalar_lea.vmem %s6, %s498
      %p500 = scmp.lt.s32.totalorder %s27, 1
      %s501 = scalar_select %p500, %s27, 1
      %s502 = smul.addr %s501, 8
      %s503 = smul.addr %s502, 4
      %s504 = scalar_lea.vmem %s7, %s503
      %p505 = scmp.lt.s32.totalorder %s27, 1
      %s506 = scalar_select %p505, %s27, 1
      %s507 = scalar_lea.vmem %s8, %s506
      %p508 = scmp.lt.s32.totalorder %s27, 1
      %s509 = scalar_select %p508, %s27, 1
      %s510 = scalar_lea.vmem %s9, %s509
      %p511 = scmp.lt.s32.totalorder %s27, 1
      %s512 = scalar_select %p511, %s27, 1
      %s513 = scalar_lea.vmem %s10, %s512
      %p514 = scmp.lt.s32.totalorder %s26, 1
      %s515 = scalar_select %p514, %s26, 1
      %s516 = smul.addr %s515, 8
      %s517 = scalar_lea.vmem %s11, %s516
      %p519 = scmp.eq.s32.totalorder %s27, 0
      // Predicated region
      $region65: #{fwd.5} parent=63 // pred_check
        %p520 = pneg %p519
      $region66: #{fwd.5} parent=63 // pred_check_branch
        %522 = sbr.rel (%p520) target = $region68
      $region67: #{fwd.5} parent=63 // pred_region
        %v523 = vld [vmem:[%s485] sm:$0xff]
        %vm524 = vcmask 261120
        %525 = vst.msk [vmem:[%s517] sm:$0xff] %vm524, %v523
      $region68: #{fwd.5} parent=63 // pred_fallthru
        _
      %v526 = vld [vmem:[%s517] sm:$0xff]
      %v527 = vpack.c.bf16 %v526, %v526
      %v528 = vld [vmem:[%s2] sm:$0xf]
      %v529 = vld [vmem:[%s2 + $0x4] sm:$0xf]
      %v530 = vld [vmem:[%s2 + $0x8] sm:$0xf]
      %v531 = vld [vmem:[%s2 + $0xc] sm:$0xf]
      %v536 = vunpack.c.l.b16 %v528
      %v537 = vunpack.c.l.b16 %v529
      %v538 = vunpack.c.l.b16 %v530
      %v539 = vunpack.c.l.b16 %v531
      %v540 = vpack.c.b16 %v537, %v536
      %v541 = vpack.c.b16 %v539, %v538
      %vm544 = vcmask 261120
      %v546 = vsel %vm544, %v527, 0
      %548 = vmatprep.subr.bf16.mxu0 0
      %549 = vmatpush1.bf16.msra.mxu0 0
      %550 = vmatprep.subr.bf16.mxu0 0
      %551 = vmatpush1.bf16.msra.mxu0 0
      %552 = vmatprep.subr.bf16.mxu0 0
      %553 = vmatpush1.bf16.msra.mxu0 0
      %554 = vmatprep.subr.bf16.mxu0 0
      %555 = vmatpush1.bf16.msra.mxu0 0
      %556 = vmatprep.subr.bf16.mxu0 0
      %557 = vmatpush1.bf16.msra.mxu0 0
      %558 = vmatprep.subr.bf16.mxu0 0
      %559 = vmatpush1.bf16.msra.mxu0 0
      %560 = vmatprep.subr.bf16.mxu0 0
      %561 = vmatpush1.bf16.msra.mxu0 %v541
      %562 = vmatprep.subr.bf16.mxu0 0
      %563 = vmatpush1.bf16.msra.mxu0 %v540
      %564 = vmatprep.subr.bf16.mxu0 0
      %565 = vmatpush2.bf16.msra.mxu0 0
      %566 = vmatprep.subr.bf16.mxu0 0
      %567 = vmatpush2.bf16.msra.mxu0 0
      %568 = vmatprep.subr.bf16.mxu0 0
      %569 = vmatpush2.bf16.msra.mxu0 0
      %570 = vmatprep.subr.bf16.mxu0 0
      %571 = vmatpush2.bf16.msra.mxu0 0
      %572 = vmatprep.subr.bf16.mxu0 0
      %573 = vmatpush2.bf16.msra.mxu0 0
      %574 = vmatprep.subr.bf16.mxu0 0
      %575 = vmatpush2.bf16.msra.mxu0 0
      %576 = vmatprep.subr.bf16.mxu0 0
      %577 = vmatpush2.bf16.msra.mxu0 0
      %578 = vmatprep.subr.bf16.mxu0 0
      %579 = vmatpush2.bf16.msra.mxu0 0
      %580 = vmatprep.mubr.bf16.mxu0 0
      %581 = vmatmul.mubr.bf16.gmra.mxu0 %v546
      %v582 = vpop.f32.mrf.mxu0
      %v583 = vadd.f32 0.0, %v582
      %v584 = vpop.f32.mrf.mxu0
      %v585 = vpop.f32.mrf.mxu0
      %v586 = vpop.f32.mrf.mxu0
      %587 = vdwg.mxu0
      %v588 = vsub.f32 0.0, %v583
      %590 = vrot.lane.b32.xlu0 %v588, 96
      %v591 = vpop.permute.xlu0 %590
      %v593 = vld [vmem:[%s1] sm:$0xf]
      %v594 = vpack.c.bf16 %v591, %v583
      %vm595 = vcmask 130048
      %v597 = vsel %vm595, %v593, 0
      %599 = vmatprep.subr.bf16.mxu0 0
      %600 = vmatpush1.bf16.msra.mxu0 0
      %601 = vmatprep.subr.bf16.mxu0 0
      %602 = vmatpush1.bf16.msra.mxu0 0
      %603 = vmatprep.subr.bf16.mxu0 0
      %604 = vmatpush1.bf16.msra.mxu0 0
      %605 = vmatprep.subr.bf16.mxu0 0
      %606 = vmatpush1.bf16.msra.mxu0 0
      %607 = vmatprep.subr.bf16.mxu0 0
      %608 = vmatpush1.bf16.msra.mxu0 0
      %609 = vmatprep.subr.bf16.mxu0 0
      %610 = vmatpush1.bf16.msra.mxu0 0
      %611 = vmatprep.subr.bf16.mxu0 0
      %612 = vmatpush1.bf16.msra.mxu0 0
      %613 = vmatprep.subr.bf16.mxu0 0
      %614 = vmatpush1.bf16.msra.mxu0 %v594
      %615 = vmatprep.subr.bf16.mxu0 0
      %616 = vmatpush2.bf16.msra.mxu0 0
      %617 = vmatprep.subr.bf16.mxu0 0
      %618 = vmatpush2.bf16.msra.mxu0 0
      %619 = vmatprep.subr.bf16.mxu0 0
      %620 = vmatpush2.bf16.msra.mxu0 0
      %621 = vmatprep.subr.bf16.mxu0 0
      %622 = vmatpush2.bf16.msra.mxu0 0
      %623 = vmatprep.subr.bf16.mxu0 0
      %624 = vmatpush2.bf16.msra.mxu0 0
      %625 = vmatprep.subr.bf16.mxu0 0
      %626 = vmatpush2.bf16.msra.mxu0 0
      %627 = vmatprep.subr.bf16.mxu0 0
      %628 = vmatpush2.bf16.msra.mxu0 0
      %629 = vmatprep.subr.bf16.mxu0 0
      %630 = vmatpush2.bf16.msra.mxu0 0
      %631 = vmatprep.mubr.bf16.mxu0 0
      %632 = vmatmul.mubr.bf16.gmra.mxu0 %v597
      %v633 = vpop.f32.mrf.mxu0
      %v634 = vadd.f32 %v526, %v633
      %v635 = vpop.f32.mrf.mxu0
      %v636 = vpop.f32.mrf.mxu0
      %v637 = vpop.f32.mrf.mxu0
      %638 = vdwg.mxu0
      %v639 = vld [vmem:[%s488] sm:$0x1]
      %v640 = vld [vmem:[%s491] sm:$0x1]
      %v641 = vsel %vm544, %v634, 0.0
      %642 = vadd.xlane.f32.xlu0 %v641
      %v643 = vpop.xlane.xlu0 %642
      %v644 = vrcp.pop 32.0
      %v645 = vmul.f32 %v643, %v644
      %v646 = vsub.f32 %v634, %v645
      %v647 = vmul.f32 %v646, %v646
      %v648 = vsel %vm544, %v647, 0.0
      %649 = vadd.xlane.f32.xlu0 %v648
      %v650 = vpop.xlane.xlu0 %649
      %v651 = vmul.f32 %v650, %v644
      %v652 = vadd.f32 %v651, 1e-12
      %v653 = vrsqrt.pop %v652
      %v654 = vmul.f32 %v646, %v653
      %v656 = vlaneseq
      %v657 = vshrl.u32 %v656, 7
      %v658 = vsub.s32 0, %v657
      %v659 = vrot.slane %v639, %v658
      %v661 = vmul.f32 %v654, %v659
      %v663 = vlaneseq
      %v664 = vshrl.u32 %v663, 7
      %v665 = vsub.s32 0, %v664
      %v666 = vrot.slane %v640, %v665
      %v668 = vadd.f32 %v661, %v666
      %v669 = vpack.c.bf16 %v668, %v668
      %v670 = vld [vmem:[%s496] sm:$0xf]
      %v671 = vld [vmem:[%s496 + $0x4] sm:$0xf]
      %v672 = vld [vmem:[%s496 + $0x8] sm:$0xf]
      %v673 = vld [vmem:[%s496 + $0xc] sm:$0xf]
      %v674 = vld [vmem:[%s499] sm:$0x1]
      %v676 = vlaneseq
      %v677 = vshrl.u32 %v676, 7
      %v678 = vsub.s32 0, %v677
      %v679 = vrot.slane %v674, %v678
      %v685 = vunpack.c.l.b16 %v670
      %v686 = vunpack.c.l.b16 %v671
      %v687 = vunpack.c.l.b16 %v672
      %v688 = vunpack.c.l.b16 %v673
      %v689 = vpack.c.b16 %v686, %v685
      %v690 = vpack.c.b16 %v688, %v687
      %v694 = vsel %vm544, %v669, 0
      %696 = vmatprep.subr.bf16.mxu0 0
      %697 = vmatpush1.bf16.msra.mxu0 0
      %698 = vmatprep.subr.bf16.mxu0 0
      %699 = vmatpush1.bf16.msra.mxu0 0
      %700 = vmatprep.subr.bf16.mxu0 0
      %701 = vmatpush1.bf16.msra.mxu0 0
      %702 = vmatprep.subr.bf16.mxu0 0
      %703 = vmatpush1.bf16.msra.mxu0 0
      %704 = vmatprep.subr.bf16.mxu0 0
      %705 = vmatpush1.bf16.msra.mxu0 0
      %706 = vmatprep.subr.bf16.mxu0 0
      %707 = vmatpush1.bf16.msra.mxu0 0
      %708 = vmatprep.subr.bf16.mxu0 0
      %709 = vmatpush1.bf16.msra.mxu0 %v690
      %710 = vmatprep.subr.bf16.mxu0 0
      %711 = vmatpush1.bf16.msra.mxu0 %v689
      %712 = vmatprep.subr.bf16.mxu0 0
      %713 = vmatpush2.bf16.msra.mxu0 0
      %714 = vmatprep.subr.bf16.mxu0 0
      %715 = vmatpush2.bf16.msra.mxu0 0
      %716 = vmatprep.subr.bf16.mxu0 0
      %717 = vmatpush2.bf16.msra.mxu0 0
      %718 = vmatprep.subr.bf16.mxu0 0
      %719 = vmatpush2.bf16.msra.mxu0 0
      %720 = vmatprep.subr.bf16.mxu0 0
      %721 = vmatpush2.bf16.msra.mxu0 0
      %722 = vmatprep.subr.bf16.mxu0 0
      %723 = vmatpush2.bf16.msra.mxu0 0
      %724 = vmatprep.subr.bf16.mxu0 0
      %725 = vmatpush2.bf16.msra.mxu0 0
      %726 = vmatprep.subr.bf16.mxu0 0
      %727 = vmatpush2.bf16.msra.mxu0 0
      %728 = vmatprep.mubr.bf16.mxu0 0
      %729 = vmatmul.mubr.bf16.gmra.mxu0 %v694
      %v730 = vpop.f32.mrf.mxu0
      %v731 = vadd.f32 %v679, %v730
      %v732 = vpop.f32.mrf.mxu0
      %v733 = vpop.f32.mrf.mxu0
      %v734 = vpop.f32.mrf.mxu0
      %735 = vdwg.mxu0
      %v736 = vmul.f32 %v731, 0.5
      %v737 = vmul.f32 %v731, 0.70710677
      %v738 = verf.f32.pop %v737
      %v739 = vadd.f32 %v738, 1.0
      %v740 = vmul.f32 %v736, %v739
      %v741 = vpack.c.bf16 %v740, %v740
      %v742 = vld [vmem:[%s504] sm:$0xf]
      %v743 = vld [vmem:[%s504 + $0x4] sm:$0xf]
      %v744 = vld [vmem:[%s504 + $0x8] sm:$0xf]
      %v745 = vld [vmem:[%s504 + $0xc] sm:$0xf]
      %v746 = vld [vmem:[%s504 + $0x10] sm:$0xf]
      %v747 = vld [vmem:[%s504 + $0x14] sm:$0xf]
      %v748 = vld [vmem:[%s504 + $0x18] sm:$0xf]
      %v749 = vld [vmem:[%s504 + $0x1c] sm:$0xf]
      %v750 = vld [vmem:[%s507] sm:$0x1]
      %v752 = vlaneseq
      %v753 = vshrl.u32 %v752, 7
      %v754 = vsub.s32 0, %v753
      %v755 = vrot.slane %v750, %v754
      %v765 = vunpack.c.l.b16 %v742
      %v766 = vunpack.c.l.b16 %v743
      %v767 = vunpack.c.l.b16 %v744
      %v768 = vunpack.c.l.b16 %v745
      %v769 = vunpack.c.l.b16 %v746
      %v770 = vunpack.c.l.b16 %v747
      %v771 = vunpack.c.l.b16 %v748
      %v772 = vunpack.c.l.b16 %v749
      %v773 = vpack.c.b16 %v766, %v765
      %v774 = vpack.c.b16 %v768, %v767
      %v775 = vpack.c.b16 %v770, %v769
      %v776 = vpack.c.b16 %v772, %v771
      %vm781 = vcmask 523264
      %v783 = vsel %vm781, %v741, 0
      %785 = vmatprep.subr.bf16.mxu0 0
      %786 = vmatpush1.bf16.msra.mxu0 0
      %787 = vmatprep.subr.bf16.mxu0 0
      %788 = vmatpush1.bf16.msra.mxu0 0
      %789 = vmatprep.subr.bf16.mxu0 0
      %790 = vmatpush1.bf16.msra.mxu0 0
      %791 = vmatprep.subr.bf16.mxu0 0
      %792 = vmatpush1.bf16.msra.mxu0 0
      %793 = vmatprep.subr.bf16.mxu0 0
      %794 = vmatpush1.bf16.msra.mxu0 %v776
      %795 = vmatprep.subr.bf16.mxu0 0
      %796 = vmatpush1.bf16.msra.mxu0 %v775
      %797 = vmatprep.subr.bf16.mxu0 0
      %798 = vmatpush1.bf16.msra.mxu0 %v774
      %799 = vmatprep.subr.bf16.mxu0 0
      %800 = vmatpush1.bf16.msra.mxu0 %v773
      %801 = vmatprep.subr.bf16.mxu0 0
      %802 = vmatpush2.bf16.msra.mxu0 0
      %803 = vmatprep.subr.bf16.mxu0 0
      %804 = vmatpush2.bf16.msra.mxu0 0
      %805 = vmatprep.subr.bf16.mxu0 0
      %806 = vmatpush2.bf16.msra.mxu0 0
      %807 = vmatprep.subr.bf16.mxu0 0
      %808 = vmatpush2.bf16.msra.mxu0 0
      %809 = vmatprep.subr.bf16.mxu0 0
      %810 = vmatpush2.bf16.msra.mxu0 0
      %811 = vmatprep.subr.bf16.mxu0 0
      %812 = vmatpush2.bf16.msra.mxu0 0
      %813 = vmatprep.subr.bf16.mxu0 0
      %814 = vmatpush2.bf16.msra.mxu0 0
      %815 = vmatprep.subr.bf16.mxu0 0
      %816 = vmatpush2.bf16.msra.mxu0 0
      %817 = vmatprep.mubr.bf16.mxu0 0
      %818 = vmatmul.mubr.bf16.gmra.mxu0 %v783
      %v819 = vpop.f32.mrf.mxu0
      %v820 = vadd.f32 %v755, %v819
      %v821 = vpop.f32.mrf.mxu0
      %v822 = vpop.f32.mrf.mxu0
      %v823 = vpop.f32.mrf.mxu0
      %824 = vdwg.mxu0
      %v825 = vadd.f32 %v820, %v668
      %v826 = vld [vmem:[%s510] sm:$0x1]
      %v827 = vld [vmem:[%s513] sm:$0x1]
      %v828 = vsel %vm544, %v825, 0.0
      %829 = vadd.xlane.f32.xlu0 %v828
      %v830 = vpop.xlane.xlu0 %829
      %v831 = vmul.f32 %v830, %v644
      %v832 = vsub.f32 %v825, %v831
      %v833 = vmul.f32 %v832, %v832
      %v834 = vsel %vm544, %v833, 0.0
      %835 = vadd.xlane.f32.xlu0 %v834
      %v836 = vpop.xlane.xlu0 %835
      %v837 = vmul.f32 %v836, %v644
      %v838 = vadd.f32 %v837, 1e-12
      %v839 = vrsqrt.pop %v838
      %v840 = vmul.f32 %v832, %v839
      %v842 = vlaneseq
      %v843 = vshrl.u32 %v842, 7
      %v844 = vsub.s32 0, %v843
      %v845 = vrot.slane %v826, %v844
      %v847 = vmul.f32 %v840, %v845
      %v849 = vlaneseq
      %v850 = vshrl.u32 %v849, 7
      %v851 = vsub.s32 0, %v850
      %v852 = vrot.slane %v827, %v851
      %v854 = vadd.f32 %v847, %v852
      %855 = vst.msk [vmem:[%s517] sm:$0xff] %vm544, %v854
      %p856 = scmp.lt.s32.totalorder %s26, 1
      %s857 = scalar_select %p856, %s26, 1
      %s858 = smul.addr %s857, 8
      %s859 = scalar_lea.vmem %s11, %s858
      // Predicated region
      $region69: #{fwd.5} parent=63 // pred_check
        %p860 = pneg %p328
      $region70: #{fwd.5} parent=63 // pred_check_branch
        %862 = sbr.rel (%p860) target = $region72
      $region71: #{fwd.5} parent=63 // pred_region
        _
      $region72: #{fwd.5} parent=63 // pred_fallthru
        _
    $region64: #{fwd.5} parent=5 // pred_fallthru
      _
    %p863 = scmp.le.s32.totalorder 2, %s17
    // Predicated region
    $region73: #{fwd.5} parent=5 // pred_check
      %p864 = pneg %p863
    $region74: #{fwd.5} parent=5 // pred_check_branch
      %866 = sbr.rel (%p864) target = $region76
    $region75: #{fwd.5} parent=5 // pred_region
      %s867 = ssub.s32 %s17, 2
      // Predicated region
      $region77: #{fwd.5} parent=75 // pred_check
        %p868 = pneg %p334
      $region78: #{fwd.5} parent=75 // pred_check_branch
        %870 = sbr.rel (%p868) target = $region80
      $region79: #{fwd.5} parent=75 // pred_region
        %p871 = scmp.lt.s32.totalorder %s28, 1
        %s872 = scalar_select %p871, %s28, 1
        %s873 = smul.addr %s872, 8
        %s874 = scalar_lea.vmem %s11, %s873
      $region80: #{fwd.5} parent=75 // pred_fallthru
        _
    $region76: #{fwd.5} parent=5 // pred_fallthru
      _
  $region6: #{fwd.5} parent=0 // loop_footer
    %s21 = sadd.s32 1, %s17
  $region7: #{fwd.5} parent=0 // loop_footer_branch
    %16 = sbr.rel target = $region3
  $region8: #{fwd.5} parent=0 // loop_exit
    _

</llo_original>
